<compile_context>
chip_gen: v7x
topology: tpu7x:2x2x1
jax: 0.10.0
libtpu: 0.0.40
codegen_flags: <defaults>
</compile_context>

<pallas_src>
import jax
import jax.numpy as jnp
from jax import lax
from jax.experimental import pallas as pl
from jax.experimental.pallas import tpu as pltpu


# --------------------------- model dimensions ------------------------------
INPUT_DIM = 512    # lane-dense (multiple of 128) reconstruction width
H1_DIM = 256
H2_DIM = 128
H3_DIM = 128
Z_DIM = 32
BATCH = 8          # fills the 8-sublane vreg dimension


# ----------------------------- Pallas kernel -------------------------------

def _mm(a, w_ref):
    """bf16 MXU matmul with f32 accumulation."""
    return jnp.dot(a.astype(jnp.bfloat16), w_ref[...],
                   preferred_element_type=jnp.float32)


def _vae_kernel(x_ref, eps_ref,
                w1, b1, w2, b2, w3, b3,          # encoder
                wmu, bmu, wsg, bsg,              # latent heads
                wd3, bd3, wd2, bd2, wd1, bd1,    # decoder
                wim, bim,                        # reconstruction head
                xrec_ref, mu_ref, sigma_ref):
    # ---- encoder: q_phi(z|x) ----
    h1 = jnp.maximum(_mm(x_ref[...], w1) + b1[...], 0.0)
    h2 = jnp.maximum(_mm(h1, w2) + b2[...], 0.0)
    h3 = jnp.maximum(_mm(h2, w3) + b3[...], 0.0)
    mu = _mm(h3, wmu) + bmu[...]
    sigma = _mm(h3, wsg) + bsg[...]

    # ---- reparameterization trick ----
    z = mu + sigma * eps_ref[...]

    # ---- decoder: p_theta(x|z) ----
    d3 = jnp.maximum(_mm(z, wd3) + bd3[...], 0.0)
    d2 = jnp.maximum(_mm(d3, wd2) + bd2[...], 0.0)
    d1 = jnp.maximum(_mm(d2, wd1) + bd1[...], 0.0)
    logits = _mm(d1, wim) + bim[...]

    xrec_ref[...] = 1.0 / (1.0 + jnp.exp(-logits))   # sigmoid (exp on EUP)
    mu_ref[...] = mu
    sigma_ref[...] = sigma


def vae_forward(x, eps, params):
    """x: (B, INPUT_DIM) f32, eps: (B, Z_DIM) f32, params: 18 packed arrays.

    Returns (x_reconstructed, mu, sigma) — same as the PyTorch forward."""
    B, D = x.shape
    Z = eps.shape[1]
    vmem = pl.BlockSpec(memory_space=pltpu.MemorySpace.VMEM)  # whole array in VMEM
    n_in = 2 + len(params)
    return pl.pallas_call(
        _vae_kernel,
        out_shape=(
            jax.ShapeDtypeStruct((B, D), jnp.float32),
            jax.ShapeDtypeStruct((B, Z), jnp.float32),
            jax.ShapeDtypeStruct((B, Z), jnp.float32),
        ),
        in_specs=[vmem] * n_in,
        out_specs=(vmem, vmem, vmem),
    )(x, eps, *params)


# ------------------------- parameters & reference --------------------------

_LAYER_DIMS = [
    (INPUT_DIM, H1_DIM),   # img_2hid1
    (H1_DIM, H2_DIM),      # hid1_2hid2
    (H2_DIM, H3_DIM),      # hid2_2hid3
    (H3_DIM, Z_DIM),       # hid3_2mu
    (H3_DIM, Z_DIM),       # hid3_2sigma
    (Z_DIM, H3_DIM),       # z_2hid3
    (H3_DIM, H2_DIM),      # hid3_2hid2
    (H2_DIM, H1_DIM),      # hid2_2hid1
    (H1_DIM, INPUT_DIM),   # hid1_2img
]


def init_torch_params(key):
    """torch.nn.Linear default init: U(-1/sqrt(fan_in), 1/sqrt(fan_in))."""
    params = []
    keys = jax.random.split(key, len(_LAYER_DIMS))
    for k, (fan_in, fan_out) in zip(keys, _LAYER_DIMS):
        kw, kb = jax.random.split(k)
        bound = 1.0 / (fan_in ** 0.5)
        w = jax.random.uniform(kw, (fan_out, fan_in), jnp.float32, -bound, bound)
        b = jax.random.uniform(kb, (fan_out,), jnp.float32, -bound, bound)
        params.append((w, b))
    return params


def pack_params(torch_params):
    """(out,in) torch weights -> (in,out) bf16 matrices; biases -> (1,out) f32."""
    packed = []
    for w, b in torch_params:
        packed.append(jnp.asarray(w.T, jnp.bfloat16))
        packed.append(b.reshape(1, -1).astype(jnp.float32))
    return tuple(packed)


def reference_forward(x, eps, torch_params):
    """Pure-JAX f32 reference with the exact PyTorch forward semantics."""
    def lin(t, layer):
        w, b = layer
        return jnp.dot(t, w.T, precision=lax.Precision.HIGHEST) + b

    relu = lambda t: jnp.maximum(t, 0.0)
    h1 = relu(lin(x, torch_params[0]))
    h2 = relu(lin(h1, torch_params[1]))
    h3 = relu(lin(h2, torch_params[2]))
    mu = lin(h3, torch_params[3])
    sigma = lin(h3, torch_params[4])
    z = mu + sigma * eps
    d3 = relu(lin(z, torch_params[5]))
    d2 = relu(lin(d3, torch_params[6]))
    d1 = relu(lin(d2, torch_params[7]))
    xrec = jax.nn.sigmoid(lin(d1, torch_params[8]))
    return xrec, mu, sigma


# ---------------------------------- main -----------------------------------

if __name__ == "__main__":
    key = jax.random.PRNGKey(0)
    k_params, k_x, k_eps = jax.random.split(key, 3)

    torch_params = init_torch_params(k_params)
    params = pack_params(torch_params)

    x = jax.random.normal(k_x, (BATCH, INPUT_DIM), jnp.float32)
    # epsilon = randn_like(sigma): sampled here (deterministically) and fed to
    # the kernel so the reparameterization trick matches the reference exactly.
    eps = jax.random.normal(k_eps, (BATCH, Z_DIM), jnp.float32)

    fwd = jax.jit(vae_forward)
    xrec, mu, sigma = jax.block_until_ready(fwd(x, eps, params))
    assert xrec.shape == (BATCH, INPUT_DIM), xrec.shape
    assert mu.shape == (BATCH, Z_DIM) and sigma.shape == (BATCH, Z_DIM)

    xr_ref, mu_ref, sg_ref = reference_forward(x, eps, torch_params)
    max_err = max(float(jnp.max(jnp.abs(xrec - xr_ref))),
                  float(jnp.max(jnp.abs(mu - mu_ref))),
                  float(jnp.max(jnp.abs(sigma - sg_ref))))
    assert max_err < 3e-2, max_err

    print("KERNEL_OK")
</pallas_src>

<mosaic_0001>
module attributes {stable_mosaic.version = 11 : i64} {
  func.func @_vae_kernel(%arg0: memref<8x512xf32, #tpu.memory_space<vmem>>, %arg1: memref<8x32xf32, #tpu.memory_space<vmem>>, %arg2: memref<512x256xbf16, #tpu.memory_space<vmem>>, %arg3: memref<1x256xf32, #tpu.memory_space<vmem>>, %arg4: memref<256x128xbf16, #tpu.memory_space<vmem>>, %arg5: memref<1x128xf32, #tpu.memory_space<vmem>>, %arg6: memref<128x128xbf16, #tpu.memory_space<vmem>>, %arg7: memref<1x128xf32, #tpu.memory_space<vmem>>, %arg8: memref<128x32xbf16, #tpu.memory_space<vmem>>, %arg9: memref<1x32xf32, #tpu.memory_space<vmem>>, %arg10: memref<128x32xbf16, #tpu.memory_space<vmem>>, %arg11: memref<1x32xf32, #tpu.memory_space<vmem>>, %arg12: memref<32x128xbf16, #tpu.memory_space<vmem>>, %arg13: memref<1x128xf32, #tpu.memory_space<vmem>>, %arg14: memref<128x128xbf16, #tpu.memory_space<vmem>>, %arg15: memref<1x128xf32, #tpu.memory_space<vmem>>, %arg16: memref<128x256xbf16, #tpu.memory_space<vmem>>, %arg17: memref<1x256xf32, #tpu.memory_space<vmem>>, %arg18: memref<256x512xbf16, #tpu.memory_space<vmem>>, %arg19: memref<1x512xf32, #tpu.memory_space<vmem>>, %arg20: memref<8x512xf32, #tpu.memory_space<vmem>>, %arg21: memref<8x32xf32, #tpu.memory_space<vmem>>, %arg22: memref<8x32xf32, #tpu.memory_space<vmem>>) attributes {dimension_semantics = [], scalar_prefetch = 0 : i64, scratch_operands = 0 : i64, tpu.core_type = #tpu.core_type<tc>} {
    %c0 = arith.constant 0 : index
    %c0_0 = arith.constant 0 : index
    %0 = vector.load %arg0[%c0, %c0_0] : memref<8x512xf32, #tpu.memory_space<vmem>>, vector<8x512xf32>
    %1 = arith.truncf %0 : vector<8x512xf32> to vector<8x512xbf16>
    %c0_1 = arith.constant 0 : index
    %c0_2 = arith.constant 0 : index
    %2 = vector.load %arg2[%c0_1, %c0_2] : memref<512x256xbf16, #tpu.memory_space<vmem>>, vector<512x256xbf16>
    %cst = arith.constant dense<0.000000e+00> : vector<8x256xf32>
    %3 = tpu.matmul %1, %2, %cst {dimension_numbers = #tpu.dot_dimension_numbers<[1], [0], [0], [1], [0, 0, 1, 1], [], []>} : vector<8x512xbf16>, vector<512x256xbf16>, vector<8x256xf32> -> vector<8x256xf32>
    %c0_3 = arith.constant 0 : index
    %c0_4 = arith.constant 0 : index
    %4 = vector.load %arg3[%c0_3, %c0_4] : memref<1x256xf32, #tpu.memory_space<vmem>>, vector<1x256xf32>
    %5 = vector.broadcast %4 : vector<1x256xf32> to vector<8x256xf32>
    %6 = arith.addf %3, %5 : vector<8x256xf32>
    %cst_5 = arith.constant 0.000000e+00 : f32
    %7 = vector.broadcast %cst_5 : f32 to vector<8x256xf32>
    %8 = arith.maximumf %6, %7 : vector<8x256xf32>
    %9 = arith.truncf %8 : vector<8x256xf32> to vector<8x256xbf16>
    %c0_6 = arith.constant 0 : index
    %c0_7 = arith.constant 0 : index
    %10 = vector.load %arg4[%c0_6, %c0_7] : memref<256x128xbf16, #tpu.memory_space<vmem>>, vector<256x128xbf16>
    %cst_8 = arith.constant dense<0.000000e+00> : vector<8x128xf32>
    %11 = tpu.matmul %9, %10, %cst_8 {dimension_numbers = #tpu.dot_dimension_numbers<[1], [0], [0], [1], [0, 0, 1, 1], [], []>} : vector<8x256xbf16>, vector<256x128xbf16>, vector<8x128xf32> -> vector<8x128xf32>
    %c0_9 = arith.constant 0 : index
    %c0_10 = arith.constant 0 : index
    %12 = vector.load %arg5[%c0_9, %c0_10] : memref<1x128xf32, #tpu.memory_space<vmem>>, vector<1x128xf32>
    %13 = vector.broadcast %12 : vector<1x128xf32> to vector<8x128xf32>
    %14 = arith.addf %11, %13 : vector<8x128xf32>
    %cst_11 = arith.constant 0.000000e+00 : f32
    %15 = vector.broadcast %cst_11 : f32 to vector<8x128xf32>
    %16 = arith.maximumf %14, %15 : vector<8x128xf32>
    %17 = arith.truncf %16 : vector<8x128xf32> to vector<8x128xbf16>
    %c0_12 = arith.constant 0 : index
    %c0_13 = arith.constant 0 : index
    %18 = vector.load %arg6[%c0_12, %c0_13] : memref<128x128xbf16, #tpu.memory_space<vmem>>, vector<128x128xbf16>
    %cst_14 = arith.constant dense<0.000000e+00> : vector<8x128xf32>
    %19 = tpu.matmul %17, %18, %cst_14 {dimension_numbers = #tpu.dot_dimension_numbers<[1], [0], [0], [1], [0, 0, 1, 1], [], []>} : vector<8x128xbf16>, vector<128x128xbf16>, vector<8x128xf32> -> vector<8x128xf32>
    %c0_15 = arith.constant 0 : index
    %c0_16 = arith.constant 0 : index
    %20 = vector.load %arg7[%c0_15, %c0_16] : memref<1x128xf32, #tpu.memory_space<vmem>>, vector<1x128xf32>
    %21 = vector.broadcast %20 : vector<1x128xf32> to vector<8x128xf32>
    %22 = arith.addf %19, %21 : vector<8x128xf32>
    %cst_17 = arith.constant 0.000000e+00 : f32
    %23 = vector.broadcast %cst_17 : f32 to vector<8x128xf32>
    %24 = arith.maximumf %22, %23 : vector<8x128xf32>
    %25 = arith.truncf %24 : vector<8x128xf32> to vector<8x128xbf16>
    %c0_18 = arith.constant 0 : index
    %c0_19 = arith.constant 0 : index
    %26 = vector.load %arg8[%c0_18, %c0_19] : memref<128x32xbf16, #tpu.memory_space<vmem>>, vector<128x32xbf16>
    %cst_20 = arith.constant dense<0.000000e+00> : vector<8x32xf32>
    %27 = tpu.matmul %25, %26, %cst_20 {dimension_numbers = #tpu.dot_dimension_numbers<[1], [0], [0], [1], [0, 0, 1, 1], [], []>} : vector<8x128xbf16>, vector<128x32xbf16>, vector<8x32xf32> -> vector<8x32xf32>
    %c0_21 = arith.constant 0 : index
    %c0_22 = arith.constant 0 : index
    %28 = vector.load %arg9[%c0_21, %c0_22] : memref<1x32xf32, #tpu.memory_space<vmem>>, vector<1x32xf32>
    %29 = vector.broadcast %28 : vector<1x32xf32> to vector<8x32xf32>
    %30 = arith.addf %27, %29 : vector<8x32xf32>
    %31 = arith.truncf %24 : vector<8x128xf32> to vector<8x128xbf16>
    %c0_23 = arith.constant 0 : index
    %c0_24 = arith.constant 0 : index
    %32 = vector.load %arg10[%c0_23, %c0_24] : memref<128x32xbf16, #tpu.memory_space<vmem>>, vector<128x32xbf16>
    %cst_25 = arith.constant dense<0.000000e+00> : vector<8x32xf32>
    %33 = tpu.matmul %31, %32, %cst_25 {dimension_numbers = #tpu.dot_dimension_numbers<[1], [0], [0], [1], [0, 0, 1, 1], [], []>} : vector<8x128xbf16>, vector<128x32xbf16>, vector<8x32xf32> -> vector<8x32xf32>
    %c0_26 = arith.constant 0 : index
    %c0_27 = arith.constant 0 : index
    %34 = vector.load %arg11[%c0_26, %c0_27] : memref<1x32xf32, #tpu.memory_space<vmem>>, vector<1x32xf32>
    %35 = vector.broadcast %34 : vector<1x32xf32> to vector<8x32xf32>
    %36 = arith.addf %33, %35 : vector<8x32xf32>
    %c0_28 = arith.constant 0 : index
    %c0_29 = arith.constant 0 : index
    %37 = vector.load %arg1[%c0_28, %c0_29] : memref<8x32xf32, #tpu.memory_space<vmem>>, vector<8x32xf32>
    %38 = arith.mulf %36, %37 : vector<8x32xf32>
    %39 = arith.addf %30, %38 : vector<8x32xf32>
    %40 = arith.truncf %39 : vector<8x32xf32> to vector<8x32xbf16>
    %c0_30 = arith.constant 0 : index
    %c0_31 = arith.constant 0 : index
    %41 = vector.load %arg12[%c0_30, %c0_31] : memref<32x128xbf16, #tpu.memory_space<vmem>>, vector<32x128xbf16>
    %cst_32 = arith.constant dense<0.000000e+00> : vector<8x128xf32>
    %42 = tpu.matmul %40, %41, %cst_32 {dimension_numbers = #tpu.dot_dimension_numbers<[1], [0], [0], [1], [0, 0, 1, 1], [], []>} : vector<8x32xbf16>, vector<32x128xbf16>, vector<8x128xf32> -> vector<8x128xf32>
    %c0_33 = arith.constant 0 : index
    %c0_34 = arith.constant 0 : index
    %43 = vector.load %arg13[%c0_33, %c0_34] : memref<1x128xf32, #tpu.memory_space<vmem>>, vector<1x128xf32>
    %44 = vector.broadcast %43 : vector<1x128xf32> to vector<8x128xf32>
    %45 = arith.addf %42, %44 : vector<8x128xf32>
    %cst_35 = arith.constant 0.000000e+00 : f32
    %46 = vector.broadcast %cst_35 : f32 to vector<8x128xf32>
    %47 = arith.maximumf %45, %46 : vector<8x128xf32>
    %48 = arith.truncf %47 : vector<8x128xf32> to vector<8x128xbf16>
    %c0_36 = arith.constant 0 : index
    %c0_37 = arith.constant 0 : index
    %49 = vector.load %arg14[%c0_36, %c0_37] : memref<128x128xbf16, #tpu.memory_space<vmem>>, vector<128x128xbf16>
    %cst_38 = arith.constant dense<0.000000e+00> : vector<8x128xf32>
    %50 = tpu.matmul %48, %49, %cst_38 {dimension_numbers = #tpu.dot_dimension_numbers<[1], [0], [0], [1], [0, 0, 1, 1], [], []>} : vector<8x128xbf16>, vector<128x128xbf16>, vector<8x128xf32> -> vector<8x128xf32>
    %c0_39 = arith.constant 0 : index
    %c0_40 = arith.constant 0 : index
    %51 = vector.load %arg15[%c0_39, %c0_40] : memref<1x128xf32, #tpu.memory_space<vmem>>, vector<1x128xf32>
    %52 = vector.broadcast %51 : vector<1x128xf32> to vector<8x128xf32>
    %53 = arith.addf %50, %52 : vector<8x128xf32>
    %cst_41 = arith.constant 0.000000e+00 : f32
    %54 = vector.broadcast %cst_41 : f32 to vector<8x128xf32>
    %55 = arith.maximumf %53, %54 : vector<8x128xf32>
    %56 = arith.truncf %55 : vector<8x128xf32> to vector<8x128xbf16>
    %c0_42 = arith.constant 0 : index
    %c0_43 = arith.constant 0 : index
    %57 = vector.load %arg16[%c0_42, %c0_43] : memref<128x256xbf16, #tpu.memory_space<vmem>>, vector<128x256xbf16>
    %cst_44 = arith.constant dense<0.000000e+00> : vector<8x256xf32>
    %58 = tpu.matmul %56, %57, %cst_44 {dimension_numbers = #tpu.dot_dimension_numbers<[1], [0], [0], [1], [0, 0, 1, 1], [], []>} : vector<8x128xbf16>, vector<128x256xbf16>, vector<8x256xf32> -> vector<8x256xf32>
    %c0_45 = arith.constant 0 : index
    %c0_46 = arith.constant 0 : index
    %59 = vector.load %arg17[%c0_45, %c0_46] : memref<1x256xf32, #tpu.memory_space<vmem>>, vector<1x256xf32>
    %60 = vector.broadcast %59 : vector<1x256xf32> to vector<8x256xf32>
    %61 = arith.addf %58, %60 : vector<8x256xf32>
    %cst_47 = arith.constant 0.000000e+00 : f32
    %62 = vector.broadcast %cst_47 : f32 to vector<8x256xf32>
    %63 = arith.maximumf %61, %62 : vector<8x256xf32>
    %64 = arith.truncf %63 : vector<8x256xf32> to vector<8x256xbf16>
    %c0_48 = arith.constant 0 : index
    %c0_49 = arith.constant 0 : index
    %65 = vector.load %arg18[%c0_48, %c0_49] : memref<256x512xbf16, #tpu.memory_space<vmem>>, vector<256x512xbf16>
    %cst_50 = arith.constant dense<0.000000e+00> : vector<8x512xf32>
    %66 = tpu.matmul %64, %65, %cst_50 {dimension_numbers = #tpu.dot_dimension_numbers<[1], [0], [0], [1], [0, 0, 1, 1], [], []>} : vector<8x256xbf16>, vector<256x512xbf16>, vector<8x512xf32> -> vector<8x512xf32>
    %c0_51 = arith.constant 0 : index
    %c0_52 = arith.constant 0 : index
    %67 = vector.load %arg19[%c0_51, %c0_52] : memref<1x512xf32, #tpu.memory_space<vmem>>, vector<1x512xf32>
    %68 = vector.broadcast %67 : vector<1x512xf32> to vector<8x512xf32>
    %69 = arith.addf %66, %68 : vector<8x512xf32>
    %cst_53 = arith.constant 0.000000e+00 : f32
    %70 = vector.broadcast %cst_53 : f32 to vector<8x512xf32>
    %71 = arith.subf %70, %69 : vector<8x512xf32>
    %72 = math.exp %71 : vector<8x512xf32>
    %cst_54 = arith.constant 1.000000e+00 : f32
    %73 = vector.broadcast %cst_54 : f32 to vector<8x512xf32>
    %74 = arith.addf %73, %72 : vector<8x512xf32>
    %cst_55 = arith.constant 1.000000e+00 : f32
    %75 = vector.broadcast %cst_55 : f32 to vector<8x512xf32>
    %76 = arith.divf %75, %74 : vector<8x512xf32>
    %c0_56 = arith.constant 0 : index
    %c0_57 = arith.constant 0 : index
    %77 = vector.load %arg20[%c0_56, %c0_57] : memref<8x512xf32, #tpu.memory_space<vmem>>, vector<8x512xf32>
    tpu.vector_store %arg20[%c0_56, %c0_57], %76 {strides = array<i32>} : memref<8x512xf32, #tpu.memory_space<vmem>>, vector<8x512xf32>,
    %c0_58 = arith.constant 0 : index
    %c0_59 = arith.constant 0 : index
    %78 = vector.load %arg21[%c0_58, %c0_59] : memref<8x32xf32, #tpu.memory_space<vmem>>, vector<8x32xf32>
    tpu.vector_store %arg21[%c0_58, %c0_59], %30 {strides = array<i32>} : memref<8x32xf32, #tpu.memory_space<vmem>>, vector<8x32xf32>,
    %c0_60 = arith.constant 0 : index
    %c0_61 = arith.constant 0 : index
    %79 = vector.load %arg22[%c0_60, %c0_61] : memref<8x32xf32, #tpu.memory_space<vmem>>, vector<8x32xf32>
    tpu.vector_store %arg22[%c0_60, %c0_61], %36 {strides = array<i32>} : memref<8x32xf32, #tpu.memory_space<vmem>>, vector<8x32xf32>,
    return
  }
}

</mosaic_0001>

<llo_original>
// kernel: vae_forward.1
$region0: #{vae_forward.1}
  #allocation0 [shape = 'u32[]', space=smem, size = 0x4, offset = 0x4, fixed_abs, tag = 'smem constant byte address 0x4 - core index']
  #allocation1 [shape = 'u32[144,128]{1,0:T(1,128)}', space=vmem, size = 0x12000, scoped, tag = 'internal scratch']
  %s0 = inlined_call_operand.hbm [shape: f32[8,512], index: 0, kind: input, shape index: {}]
  %s1 = inlined_call_operand.hbm [shape: f32[8,32], index: 1, kind: input, shape index: {}]
  %s2 = inlined_call_operand.hbm [shape: bf16[512,256], index: 2, kind: input, shape index: {}]
  %s3 = inlined_call_operand.hbm [shape: f32[1,256], index: 3, kind: input, shape index: {}]
  %s4 = inlined_call_operand.vmem [shape: bf16[256,128], index: 4, kind: input, shape index: {}]
  %s5 = inlined_call_operand.vmem [shape: f32[1,128], index: 5, kind: input, shape index: {}]
  %s6 = inlined_call_operand.hbm [shape: bf16[128,128], index: 6, kind: input, shape index: {}]
  %s7 = inlined_call_operand.hbm [shape: f32[1,128], index: 7, kind: input, shape index: {}]
  %s8 = inlined_call_operand.vmem [shape: bf16[128,32], index: 8, kind: input, shape index: {}]
  %s9 = inlined_call_operand.hbm [shape: f32[1,32], index: 9, kind: input, shape index: {}]
  %s10 = inlined_call_operand.vmem [shape: bf16[128,32], index: 10, kind: input, shape index: {}]
  %s11 = inlined_call_operand.vmem [shape: f32[1,32], index: 11, kind: input, shape index: {}]
  %s12 = inlined_call_operand.hbm [shape: bf16[32,128], index: 12, kind: input, shape index: {}]
  %s13 = inlined_call_operand.vmem [shape: f32[1,128], index: 13, kind: input, shape index: {}]
  %s14 = inlined_call_operand.vmem [shape: bf16[128,128], index: 14, kind: input, shape index: {}]
  %s15 = inlined_call_operand.vmem [shape: f32[1,128], index: 15, kind: input, shape index: {}]
  %s16 = inlined_call_operand.hbm [shape: bf16[128,256], index: 16, kind: input, shape index: {}]
  %s17 = inlined_call_operand.vmem [shape: f32[1,256], index: 17, kind: input, shape index: {}]
  %s18 = inlined_call_operand.hbm [shape: bf16[256,512], index: 18, kind: input, shape index: {}]
  %s19 = inlined_call_operand.vmem [shape: f32[1,512], index: 19, kind: input, shape index: {}]
  %s20 = inlined_call_operand.hbm [shape: f32[8,512], index: 20, kind: output, shape index: {0}]
  %s21 = inlined_call_operand.hbm [shape: f32[8,32], index: 21, kind: output, shape index: {1}]
  %s22 = inlined_call_operand.hbm [shape: f32[8,32], index: 22, kind: output, shape index: {2}]
  %23 = xla_tuple %s20, %s21, %s22
  %s24 = sld [smem:[#allocation0]]
  $region146: #{vae_forward.1} parent=0
    _
  %s26 = ssub.s32 1, %s24
  %s27 = scalar_select 0, %s26, %s24
  $region1: #{vae_forward.1} parent=0
    #allocation2 [shape = 'u8[16384]{0}', space=vmem, size = 0x4000, scoped, tag = 'input window, operand 0, single buffered']
    #allocation3 [shape = 's32[1]{0}', space=sflag, size = 0x4, scoped, tag = 'scoped memory for vae_forward.1']
    #allocation4 [shape = 's32[1]{0}', space=sflag, size = 0x4, scoped, tag = 'scoped memory for vae_forward.1']
    #allocation5 [shape = 'u8[4096]{0}', space=vmem, size = 0x1000, scoped, tag = 'input window, operand 1, single buffered']
    #allocation6 [shape = 's32[1]{0}', space=sflag, size = 0x4, scoped, tag = 'scoped memory for vae_forward.1']
    #allocation7 [shape = 'u8[262144]{0}', space=vmem, size = 0x40000, scoped, tag = 'input window, operand 2, single buffered']
    #allocation8 [shape = 'u8[1024]{0}', space=vmem, size = 0x400, scoped, tag = 'input window, operand 3, single buffered']
    #allocation9 [shape = 's32[1]{0}', space=sflag, size = 0x4, scoped, tag = 'scoped memory for vae_forward.1']
    #allocation10 [shape = 'u8[32768]{0}', space=vmem, size = 0x8000, scoped, tag = 'input window, operand 6, single buffered']
    #allocation11 [shape = 'u8[512]{0}', space=vmem, size = 0x400, scoped, tag = 'input window, operand 7, single buffered']
    #allocation12 [shape = 's32[1]{0}', space=sflag, size = 0x4, scoped, tag = 'scoped memory for vae_forward.1']
    #allocation13 [shape = 'u8[512]{0}', space=vmem, size = 0x400, scoped, tag = 'input window, operand 9, single buffered']
    #allocation14 [shape = 'u8[8192]{0}', space=vmem, size = 0x2000, scoped, tag = 'input window, operand 12, single buffered']
    #allocation15 [shape = 's32[1]{0}', space=sflag, size = 0x4, scoped, tag = 'scoped memory for vae_forward.1']
    #allocation16 [shape = 'u8[65536]{0}', space=vmem, size = 0x10000, scoped, tag = 'input window, operand 16, single buffered']
    #allocation17 [shape = 'u8[262144]{0}', space=vmem, size = 0x40000, scoped, tag = 'input window, operand 18, single buffered']
    #allocation18 [shape = 's32[1]{0}', space=sflag, size = 0x4, scoped, tag = 'scoped memory for vae_forward.1']
    #allocation19 [shape = 'u8[16384]{0}', space=vmem, size = 0x4000, scoped, tag = 'output window, operand 0, single buffered']
    #allocation20 [shape = 'u8[4096]{0}', space=vmem, size = 0x1000, scoped, tag = 'output window, operand 1, single buffered']
    #allocation21 [shape = 's32[1]{0}', space=sflag, size = 0x4, scoped, tag = 'scoped memory for vae_forward.1']
    #allocation22 [shape = 'u8[4096]{0}', space=vmem, size = 0x1000, scoped, tag = 'output window, operand 2, single buffered']
    %28 = vsyncpa [#allocation3], 0
    %29 = vsyncpa [#allocation6], 0
    %30 = vsyncpa [#allocation9], 0
    %31 = vsyncpa [#allocation12], 0
    %32 = vsyncpa [#allocation15], 0
    %33 = vsyncpa [#allocation18], 0
    %34 = vsyncpa [#allocation4], 0
    %35 = vsyncpa [#allocation21], 0
    // Predicated region
    $region2: #{vae_forward.1} parent=1 // pred_check
      _
    $region3: #{vae_forward.1} parent=1 // pred_check_branch
      %37 = sbr.rel (0) target = $region5
    $region4: #{vae_forward.1} parent=1 // pred_region
      %s39 = ssub.s32 512, 512
      %40 = vsyncadd [#allocation3], %s39
      %s42 = sshll.u32 [#allocation2], 4
      %s43 = int_to_ptr.vmem [resolvable:$true] %s42
      %45 = dma.hbm_to_vmem [thread:$0]  %s0, 512, %s43, [#allocation3]
    $region5: #{vae_forward.1} parent=1 // pred_fallthru
      _
    // Predicated region
    $region6: #{vae_forward.1} parent=1 // pred_check
      _
    $region7: #{vae_forward.1} parent=1 // pred_check_branch
      %47 = sbr.rel (0) target = $region9
    $region8: #{vae_forward.1} parent=1 // pred_region
      %s49 = ssub.s32 128, 128
      %50 = vsyncadd [#allocation6], %s49
      %s52 = sshll.u32 [#allocation5], 4
      %s53 = int_to_ptr.vmem [resolvable:$true] %s52
      %55 = dma.hbm_to_vmem [thread:$0]  %s1, 128, %s53, [#allocation6]
    $region9: #{vae_forward.1} parent=1 // pred_fallthru
      _
    // Predicated region
    $region10: #{vae_forward.1} parent=1 // pred_check
      _
    $region11: #{vae_forward.1} parent=1 // pred_check_branch
      %57 = sbr.rel (0) target = $region13
    $region12: #{vae_forward.1} parent=1 // pred_region
      %s59 = ssub.s32 8192, 8192
      %60 = vsyncadd [#allocation6], %s59
      %s61 = sshll.u32 [#allocation7], 4
      %s62 = int_to_ptr.vmem [resolvable:$true] %s61
      %67 = dma.hbm_to_vmem [thread:$0]  %s2, 8192, %s62, [#allocation6], 128, 128, 8
    $region13: #{vae_forward.1} parent=1 // pred_fallthru
      _
    // Predicated region
    $region14: #{vae_forward.1} parent=1 // pred_check
      _
    $region15: #{vae_forward.1} parent=1 // pred_check_branch
      %69 = sbr.rel (0) target = $region17
    $region16: #{vae_forward.1} parent=1 // pred_region
      %s71 = ssub.s32 32, 32
      %72 = vsyncadd [#allocation9], %s71
      %s74 = sshll.u32 [#allocation8], 4
      %s75 = int_to_ptr.vmem [resolvable:$true] %s74
      %77 = dma.hbm_to_vmem [thread:$0]  %s3, 32, %s75, [#allocation9]
    $region17: #{vae_forward.1} parent=1 // pred_fallthru
      _
    // Predicated region
    $region18: #{vae_forward.1} parent=1 // pred_check
      _
    $region19: #{vae_forward.1} parent=1 // pred_check_branch
      %79 = sbr.rel (0) target = $region21
    $region20: #{vae_forward.1} parent=1 // pred_region
      _
    $region21: #{vae_forward.1} parent=1 // pred_fallthru
      _
    // Predicated region
    $region22: #{vae_forward.1} parent=1 // pred_check
      _
    $region23: #{vae_forward.1} parent=1 // pred_check_branch
      %81 = sbr.rel (0) target = $region25
    $region24: #{vae_forward.1} parent=1 // pred_region
      _
    $region25: #{vae_forward.1} parent=1 // pred_fallthru
      _
    // Predicated region
    $region26: #{vae_forward.1} parent=1 // pred_check
      _
    $region27: #{vae_forward.1} parent=1 // pred_check_branch
      %83 = sbr.rel (0) target = $region29
    $region28: #{vae_forward.1} parent=1 // pred_region
      %s85 = ssub.s32 1024, 1024
      %86 = vsyncadd [#allocation9], %s85
      %s87 = sshll.u32 [#allocation10], 4
      %s88 = int_to_ptr.vmem [resolvable:$true] %s87
      %93 = dma.hbm_to_vmem [thread:$0]  %s6, 1024, %s88, [#allocation9], 64, 64, 4
    $region29: #{vae_forward.1} parent=1 // pred_fallthru
      _
    // Predicated region
    $region30: #{vae_forward.1} parent=1 // pred_check
      _
    $region31: #{vae_forward.1} parent=1 // pred_check_branch
      %95 = sbr.rel (0) target = $region33
    $region32: #{vae_forward.1} parent=1 // pred_region
      %s97 = ssub.s32 16, 16
      %98 = vsyncadd [#allocation12], %s97
      %s100 = sshll.u32 [#allocation11], 4
      %s101 = int_to_ptr.vmem [resolvable:$true] %s100
      %103 = dma.hbm_to_vmem [thread:$0]  %s7, 16, %s101, [#allocation12]
    $region33: #{vae_forward.1} parent=1 // pred_fallthru
      _
    // Predicated region
    $region34: #{vae_forward.1} parent=1 // pred_check
      _
    $region35: #{vae_forward.1} parent=1 // pred_check_branch
      %105 = sbr.rel (0) target = $region37
    $region36: #{vae_forward.1} parent=1 // pred_region
      _
    $region37: #{vae_forward.1} parent=1 // pred_fallthru
      _
    // Predicated region
    $region38: #{vae_forward.1} parent=1 // pred_check
      _
    $region39: #{vae_forward.1} parent=1 // pred_check_branch
      %107 = sbr.rel (0) target = $region41
    $region40: #{vae_forward.1} parent=1 // pred_region
      %s109 = ssub.s32 16, 16
      %110 = vsyncadd [#allocation12], %s109
      %s112 = sshll.u32 [#allocation13], 4
      %s113 = int_to_ptr.vmem [resolvable:$true] %s112
      %115 = dma.hbm_to_vmem [thread:$0]  %s9, 16, %s113, [#allocation12]
    $region41: #{vae_forward.1} parent=1 // pred_fallthru
      _
    // Predicated region
    $region42: #{vae_forward.1} parent=1 // pred_check
      _
    $region43: #{vae_forward.1} parent=1 // pred_check_branch
      %117 = sbr.rel (0) target = $region45
    $region44: #{vae_forward.1} parent=1 // pred_region
      _
    $region45: #{vae_forward.1} parent=1 // pred_fallthru
      _
    // Predicated region
    $region46: #{vae_forward.1} parent=1 // pred_check
      _
    $region47: #{vae_forward.1} parent=1 // pred_check_branch
      %119 = sbr.rel (0) target = $region49
    $region48: #{vae_forward.1} parent=1 // pred_region
      _
    $region49: #{vae_forward.1} parent=1 // pred_fallthru
      _
    // Predicated region
    $region50: #{vae_forward.1} parent=1 // pred_check
      _
    $region51: #{vae_forward.1} parent=1 // pred_check_branch
      %121 = sbr.rel (0) target = $region53
    $region52: #{vae_forward.1} parent=1 // pred_region
      %s123 = ssub.s32 256, 256
      %124 = vsyncadd [#allocation15], %s123
      %s125 = sshll.u32 [#allocation14], 4
      %s126 = int_to_ptr.vmem [resolvable:$true] %s125
      %131 = dma.hbm_to_vmem [thread:$0]  %s12, 256, %s126, [#allocation15], 64, 64, 4
    $region53: #{vae_forward.1} parent=1 // pred_fallthru
      _
    // Predicated region
    $region54: #{vae_forward.1} parent=1 // pred_check
      _
    $region55: #{vae_forward.1} parent=1 // pred_check_branch
      %133 = sbr.rel (0) target = $region57
    $region56: #{vae_forward.1} parent=1 // pred_region
      _
    $region57: #{vae_forward.1} parent=1 // pred_fallthru
      _
    // Predicated region
    $region58: #{vae_forward.1} parent=1 // pred_check
      _
    $region59: #{vae_forward.1} parent=1 // pred_check_branch
      %135 = sbr.rel (0) target = $region61
    $region60: #{vae_forward.1} parent=1 // pred_region
      _
    $region61: #{vae_forward.1} parent=1 // pred_fallthru
      _
    // Predicated region
    $region62: #{vae_forward.1} parent=1 // pred_check
      _
    $region63: #{vae_forward.1} parent=1 // pred_check_branch
      %137 = sbr.rel (0) target = $region65
    $region64: #{vae_forward.1} parent=1 // pred_region
      _
    $region65: #{vae_forward.1} parent=1 // pred_fallthru
      _
    // Predicated region
    $region66: #{vae_forward.1} parent=1 // pred_check
      _
    $region67: #{vae_forward.1} parent=1 // pred_check_branch
      %139 = sbr.rel (0) target = $region69
    $region68: #{vae_forward.1} parent=1 // pred_region
      %s141 = ssub.s32 2048, 2048
      %142 = vsyncadd [#allocation15], %s141
      %s143 = sshll.u32 [#allocation16], 4
      %s144 = int_to_ptr.vmem [resolvable:$true] %s143
      %149 = dma.hbm_to_vmem [thread:$0]  %s16, 2048, %s144, [#allocation15], 128, 128, 8
    $region69: #{vae_forward.1} parent=1 // pred_fallthru
      _
    // Predicated region
    $region70: #{vae_forward.1} parent=1 // pred_check
      _
    $region71: #{vae_forward.1} parent=1 // pred_check_branch
      %151 = sbr.rel (0) target = $region73
    $region72: #{vae_forward.1} parent=1 // pred_region
      _
    $region73: #{vae_forward.1} parent=1 // pred_fallthru
      _
    // Predicated region
    $region74: #{vae_forward.1} parent=1 // pred_check
      _
    $region75: #{vae_forward.1} parent=1 // pred_check_branch
      %153 = sbr.rel (0) target = $region77
    $region76: #{vae_forward.1} parent=1 // pred_region
      %s155 = ssub.s32 8192, 8192
      %156 = vsyncadd [#allocation18], %s155
      %s157 = sshll.u32 [#allocation17], 4
      %s158 = int_to_ptr.vmem [resolvable:$true] %s157
      %163 = dma.hbm_to_vmem [thread:$0]  %s18, 8192, %s158, [#allocation18], 256, 256, 16
    $region77: #{vae_forward.1} parent=1 // pred_fallthru
      _
    // Predicated region
    $region78: #{vae_forward.1} parent=1 // pred_check
      _
    $region79: #{vae_forward.1} parent=1 // pred_check_branch
      %165 = sbr.rel (0) target = $region81
    $region80: #{vae_forward.1} parent=1 // pred_region
      _
    $region81: #{vae_forward.1} parent=1 // pred_fallthru
      _
    // Predicated region
    $region82: #{vae_forward.1} parent=1 // pred_check
      _
    $region83: #{vae_forward.1} parent=1 // pred_check_branch
      %167 = sbr.rel (0) target = $region85
    $region84: #{vae_forward.1} parent=1 // pred_region
      %168 = dma.done [#allocation3], 512
    $region85: #{vae_forward.1} parent=1 // pred_fallthru
      _
    // Predicated region
    $region86: #{vae_forward.1} parent=1 // pred_check
      _
    $region87: #{vae_forward.1} parent=1 // pred_check_branch
      %170 = sbr.rel (0) target = $region89
    $region88: #{vae_forward.1} parent=1 // pred_region
      %171 = dma.done [#allocation6], 128
    $region89: #{vae_forward.1} parent=1 // pred_fallthru
      _
    // Predicated region
    $region90: #{vae_forward.1} parent=1 // pred_check
      _
    $region91: #{vae_forward.1} parent=1 // pred_check_branch
      %173 = sbr.rel (0) target = $region93
    $region92: #{vae_forward.1} parent=1 // pred_region
      %174 = dma.done [#allocation6], 8192
    $region93: #{vae_forward.1} parent=1 // pred_fallthru
      _
    // Predicated region
    $region94: #{vae_forward.1} parent=1 // pred_check
      _
    $region95: #{vae_forward.1} parent=1 // pred_check_branch
      %176 = sbr.rel (0) target = $region97
    $region96: #{vae_forward.1} parent=1 // pred_region
      %177 = dma.done [#allocation9], 32
    $region97: #{vae_forward.1} parent=1 // pred_fallthru
      _
    // Predicated region
    $region98: #{vae_forward.1} parent=1 // pred_check
      _
    $region99: #{vae_forward.1} parent=1 // pred_check_branch
      %179 = sbr.rel (0) target = $region101
    $region100: #{vae_forward.1} parent=1 // pred_region
      %180 = dma.done [#allocation9], 1024
    $region101: #{vae_forward.1} parent=1 // pred_fallthru
      _
    // Predicated region
    $region102: #{vae_forward.1} parent=1 // pred_check
      _
    $region103: #{vae_forward.1} parent=1 // pred_check_branch
      %182 = sbr.rel (0) target = $region105
    $region104: #{vae_forward.1} parent=1 // pred_region
      %183 = dma.done [#allocation12], 16
    $region105: #{vae_forward.1} parent=1 // pred_fallthru
      _
    // Predicated region
    $region106: #{vae_forward.1} parent=1 // pred_check
      _
    $region107: #{vae_forward.1} parent=1 // pred_check_branch
      %185 = sbr.rel (0) target = $region109
    $region108: #{vae_forward.1} parent=1 // pred_region
      %186 = dma.done [#allocation12], 16
    $region109: #{vae_forward.1} parent=1 // pred_fallthru
      _
    // Predicated region
    $region110: #{vae_forward.1} parent=1 // pred_check
      _
    $region111: #{vae_forward.1} parent=1 // pred_check_branch
      %188 = sbr.rel (0) target = $region113
    $region112: #{vae_forward.1} parent=1 // pred_region
      %189 = dma.done [#allocation15], 256
    $region113: #{vae_forward.1} parent=1 // pred_fallthru
      _
    // Predicated region
    $region114: #{vae_forward.1} parent=1 // pred_check
      _
    $region115: #{vae_forward.1} parent=1 // pred_check_branch
      %191 = sbr.rel (0) target = $region117
    $region116: #{vae_forward.1} parent=1 // pred_region
      %192 = dma.done [#allocation15], 2048
    $region117: #{vae_forward.1} parent=1 // pred_fallthru
      _
    // Predicated region
    $region118: #{vae_forward.1} parent=1 // pred_check
      _
    $region119: #{vae_forward.1} parent=1 // pred_check_branch
      %194 = sbr.rel (0) target = $region121
    $region120: #{vae_forward.1} parent=1 // pred_region
      %195 = dma.done [#allocation18], 8192
    $region121: #{vae_forward.1} parent=1 // pred_fallthru
      _
    %v197 = vld [vmem:[#allocation2] sm:$0xff]
    %v198 = vld [vmem:[#allocation2 + $0x8] sm:$0xff]
    %v199 = vld [vmem:[#allocation2 + $0x10] sm:$0xff]
    %v200 = vld [vmem:[#allocation2 + $0x18] sm:$0xff]
    %v201 = vpack.c.bf16 %v197, %v197
    %v202 = vpack.c.bf16 %v198, %v198
    %v203 = vpack.c.bf16 %v199, %v199
    %v204 = vpack.c.bf16 %v200, %v200
    %v205 = vld [vmem:[#allocation7] sm:$0xff]
    %v206 = vld [vmem:[#allocation7 + $0x8] sm:$0xff]
    %v207 = vld [vmem:[#allocation7 + $0x10] sm:$0xff]
    %v208 = vld [vmem:[#allocation7 + $0x18] sm:$0xff]
    %v209 = vld [vmem:[#allocation7 + $0x20] sm:$0xff]
    %v210 = vld [vmem:[#allocation7 + $0x28] sm:$0xff]
    %v211 = vld [vmem:[#allocation7 + $0x30] sm:$0xff]
    %v212 = vld [vmem:[#allocation7 + $0x38] sm:$0xff]
    %v213 = vld [vmem:[#allocation7 + $0x40] sm:$0xff]
    %v214 = vld [vmem:[#allocation7 + $0x48] sm:$0xff]
    %v215 = vld [vmem:[#allocation7 + $0x50] sm:$0xff]
    %v216 = vld [vmem:[#allocation7 + $0x58] sm:$0xff]
    %v217 = vld [vmem:[#allocation7 + $0x60] sm:$0xff]
    %v218 = vld [vmem:[#allocation7 + $0x68] sm:$0xff]
    %v219 = vld [vmem:[#allocation7 + $0x70] sm:$0xff]
    %v220 = vld [vmem:[#allocation7 + $0x78] sm:$0xff]
    %v221 = vld [vmem:[#allocation7 + $0x80] sm:$0xff]
    %v222 = vld [vmem:[#allocation7 + $0x88] sm:$0xff]
    %v223 = vld [vmem:[#allocation7 + $0x90] sm:$0xff]
    %v224 = vld [vmem:[#allocation7 + $0x98] sm:$0xff]
    %v225 = vld [vmem:[#allocation7 + $0xa0] sm:$0xff]
    %v226 = vld [vmem:[#allocation7 + $0xa8] sm:$0xff]
    %v227 = vld [vmem:[#allocation7 + $0xb0] sm:$0xff]
    %v228 = vld [vmem:[#allocation7 + $0xb8] sm:$0xff]
    %v229 = vld [vmem:[#allocation7 + $0xc0] sm:$0xff]
    %v230 = vld [vmem:[#allocation7 + $0xc8] sm:$0xff]
    %v231 = vld [vmem:[#allocation7 + $0xd0] sm:$0xff]
    %v232 = vld [vmem:[#allocation7 + $0xd8] sm:$0xff]
    %v233 = vld [vmem:[#allocation7 + $0xe0] sm:$0xff]
    %v234 = vld [vmem:[#allocation7 + $0xe8] sm:$0xff]
    %v235 = vld [vmem:[#allocation7 + $0xf0] sm:$0xff]
    %v236 = vld [vmem:[#allocation7 + $0xf8] sm:$0xff]
    %v237 = vld [vmem:[#allocation7 + $0x100] sm:$0xff]
    %v238 = vld [vmem:[#allocation7 + $0x108] sm:$0xff]
    %v239 = vld [vmem:[#allocation7 + $0x110] sm:$0xff]
    %v240 = vld [vmem:[#allocation7 + $0x118] sm:$0xff]
    %v241 = vld [vmem:[#allocation7 + $0x120] sm:$0xff]
    %v242 = vld [vmem:[#allocation7 + $0x128] sm:$0xff]
    %v243 = vld [vmem:[#allocation7 + $0x130] sm:$0xff]
    %v244 = vld [vmem:[#allocation7 + $0x138] sm:$0xff]
    %v245 = vld [vmem:[#allocation7 + $0x140] sm:$0xff]
    %v246 = vld [vmem:[#allocation7 + $0x148] sm:$0xff]
    %v247 = vld [vmem:[#allocation7 + $0x150] sm:$0xff]
    %v248 = vld [vmem:[#allocation7 + $0x158] sm:$0xff]
    %v249 = vld [vmem:[#allocation7 + $0x160] sm:$0xff]
    %v250 = vld [vmem:[#allocation7 + $0x168] sm:$0xff]
    %v251 = vld [vmem:[#allocation7 + $0x170] sm:$0xff]
    %v252 = vld [vmem:[#allocation7 + $0x178] sm:$0xff]
    %v253 = vld [vmem:[#allocation7 + $0x180] sm:$0xff]
    %v254 = vld [vmem:[#allocation7 + $0x188] sm:$0xff]
    %v255 = vld [vmem:[#allocation7 + $0x190] sm:$0xff]
    %v256 = vld [vmem:[#allocation7 + $0x198] sm:$0xff]
    %v257 = vld [vmem:[#allocation7 + $0x1a0] sm:$0xff]
    %v258 = vld [vmem:[#allocation7 + $0x1a8] sm:$0xff]
    %v259 = vld [vmem:[#allocation7 + $0x1b0] sm:$0xff]
    %v260 = vld [vmem:[#allocation7 + $0x1b8] sm:$0xff]
    %v261 = vld [vmem:[#allocation7 + $0x1c0] sm:$0xff]
    %v262 = vld [vmem:[#allocation7 + $0x1c8] sm:$0xff]
    %v263 = vld [vmem:[#allocation7 + $0x1d0] sm:$0xff]
    %v264 = vld [vmem:[#allocation7 + $0x1d8] sm:$0xff]
    %v265 = vld [vmem:[#allocation7 + $0x1e0] sm:$0xff]
    %v266 = vld [vmem:[#allocation7 + $0x1e8] sm:$0xff]
    %v267 = vld [vmem:[#allocation7 + $0x1f0] sm:$0xff]
    %v268 = vld [vmem:[#allocation7 + $0x1f8] sm:$0xff]
    %v269 = vld [vmem:[#allocation8] sm:$0x3]
    %v271 = vlaneseq
    %v272 = vshrl.u32 %v271, 7
    %v273 = vsub.s32 0, %v272
    %v274 = vrot.slane %v269, %v273
    %v275 = vlaneseq
    %v276 = vshrl.u32 %v275, 7
    %v277 = vsub.s32 1, %v276
    %v278 = vrot.slane %v269, %v277
    %v345 = vunpack.c.l.b16 %v205
    %v346 = vunpack.c.h.b16 %v205
    %v347 = vunpack.c.l.b16 %v206
    %v348 = vunpack.c.h.b16 %v206
    %v349 = vunpack.c.l.b16 %v207
    %v350 = vunpack.c.h.b16 %v207
    %v351 = vunpack.c.l.b16 %v208
    %v352 = vunpack.c.h.b16 %v208
    %v353 = vunpack.c.l.b16 %v209
    %v354 = vunpack.c.h.b16 %v209
    %v355 = vunpack.c.l.b16 %v210
    %v356 = vunpack.c.h.b16 %v210
    %v357 = vunpack.c.l.b16 %v211
    %v358 = vunpack.c.h.b16 %v211
    %v359 = vunpack.c.l.b16 %v212
    %v360 = vunpack.c.h.b16 %v212
    %v361 = vunpack.c.l.b16 %v213
    %v362 = vunpack.c.h.b16 %v213
    %v363 = vunpack.c.l.b16 %v214
    %v364 = vunpack.c.h.b16 %v214
    %v365 = vunpack.c.l.b16 %v215
    %v366 = vunpack.c.h.b16 %v215
    %v367 = vunpack.c.l.b16 %v216
    %v368 = vunpack.c.h.b16 %v216
    %v369 = vunpack.c.l.b16 %v217
    %v370 = vunpack.c.h.b16 %v217
    %v371 = vunpack.c.l.b16 %v218
    %v372 = vunpack.c.h.b16 %v218
    %v373 = vunpack.c.l.b16 %v219
    %v374 = vunpack.c.h.b16 %v219
    %v375 = vunpack.c.l.b16 %v220
    %v376 = vunpack.c.h.b16 %v220
    %v377 = vunpack.c.l.b16 %v221
    %v378 = vunpack.c.h.b16 %v221
    %v379 = vunpack.c.l.b16 %v222
    %v380 = vunpack.c.h.b16 %v222
    %v381 = vunpack.c.l.b16 %v223
    %v382 = vunpack.c.h.b16 %v223
    %v383 = vunpack.c.l.b16 %v224
    %v384 = vunpack.c.h.b16 %v224
    %v385 = vunpack.c.l.b16 %v225
    %v386 = vunpack.c.h.b16 %v225
    %v387 = vunpack.c.l.b16 %v226
    %v388 = vunpack.c.h.b16 %v226
    %v389 = vunpack.c.l.b16 %v227
    %v390 = vunpack.c.h.b16 %v227
    %v391 = vunpack.c.l.b16 %v228
    %v392 = vunpack.c.h.b16 %v228
    %v393 = vunpack.c.l.b16 %v229
    %v394 = vunpack.c.h.b16 %v229
    %v395 = vunpack.c.l.b16 %v230
    %v396 = vunpack.c.h.b16 %v230
    %v397 = vunpack.c.l.b16 %v231
    %v398 = vunpack.c.h.b16 %v231
    %v399 = vunpack.c.l.b16 %v232
    %v400 = vunpack.c.h.b16 %v232
    %v401 = vunpack.c.l.b16 %v233
    %v402 = vunpack.c.h.b16 %v233
    %v403 = vunpack.c.l.b16 %v234
    %v404 = vunpack.c.h.b16 %v234
    %v405 = vunpack.c.l.b16 %v235
    %v406 = vunpack.c.h.b16 %v235
    %v407 = vunpack.c.l.b16 %v236
    %v408 = vunpack.c.h.b16 %v236
    %v409 = vunpack.c.l.b16 %v237
    %v410 = vunpack.c.h.b16 %v237
    %v411 = vunpack.c.l.b16 %v238
    %v412 = vunpack.c.h.b16 %v238
    %v413 = vunpack.c.l.b16 %v239
    %v414 = vunpack.c.h.b16 %v239
    %v415 = vunpack.c.l.b16 %v240
    %v416 = vunpack.c.h.b16 %v240
    %v417 = vunpack.c.l.b16 %v241
    %v418 = vunpack.c.h.b16 %v241
    %v419 = vunpack.c.l.b16 %v242
    %v420 = vunpack.c.h.b16 %v242
    %v421 = vunpack.c.l.b16 %v243
    %v422 = vunpack.c.h.b16 %v243
    %v423 = vunpack.c.l.b16 %v244
    %v424 = vunpack.c.h.b16 %v244
    %v425 = vunpack.c.l.b16 %v245
    %v426 = vunpack.c.h.b16 %v245
    %v427 = vunpack.c.l.b16 %v246
    %v428 = vunpack.c.h.b16 %v246
    %v429 = vunpack.c.l.b16 %v247
    %v430 = vunpack.c.h.b16 %v247
    %v431 = vunpack.c.l.b16 %v248
    %v432 = vunpack.c.h.b16 %v248
    %v433 = vunpack.c.l.b16 %v249
    %v434 = vunpack.c.h.b16 %v249
    %v435 = vunpack.c.l.b16 %v250
    %v436 = vunpack.c.h.b16 %v250
    %v437 = vunpack.c.l.b16 %v251
    %v438 = vunpack.c.h.b16 %v251
    %v439 = vunpack.c.l.b16 %v252
    %v440 = vunpack.c.h.b16 %v252
    %v441 = vunpack.c.l.b16 %v253
    %v442 = vunpack.c.h.b16 %v253
    %v443 = vunpack.c.l.b16 %v254
    %v444 = vunpack.c.h.b16 %v254
    %v445 = vunpack.c.l.b16 %v255
    %v446 = vunpack.c.h.b16 %v255
    %v447 = vunpack.c.l.b16 %v256
    %v448 = vunpack.c.h.b16 %v256
    %v449 = vunpack.c.l.b16 %v257
    %v450 = vunpack.c.h.b16 %v257
    %v451 = vunpack.c.l.b16 %v258
    %v452 = vunpack.c.h.b16 %v258
    %v453 = vunpack.c.l.b16 %v259
    %v454 = vunpack.c.h.b16 %v259
    %v455 = vunpack.c.l.b16 %v260
    %v456 = vunpack.c.h.b16 %v260
    %v457 = vunpack.c.l.b16 %v261
    %v458 = vunpack.c.h.b16 %v261
    %v459 = vunpack.c.l.b16 %v262
    %v460 = vunpack.c.h.b16 %v262
    %v461 = vunpack.c.l.b16 %v263
    %v462 = vunpack.c.h.b16 %v263
    %v463 = vunpack.c.l.b16 %v264
    %v464 = vunpack.c.h.b16 %v264
    %v465 = vunpack.c.l.b16 %v265
    %v466 = vunpack.c.h.b16 %v265
    %v467 = vunpack.c.l.b16 %v266
    %v468 = vunpack.c.h.b16 %v266
    %v469 = vunpack.c.l.b16 %v267
    %v470 = vunpack.c.h.b16 %v267
    %v471 = vunpack.c.l.b16 %v268
    %v472 = vunpack.c.h.b16 %v268
    %v473 = vpack.c.b16 %v347, %v345
    %v474 = vpack.c.b16 %v348, %v346
    %v475 = vpack.c.b16 %v351, %v349
    %v476 = vpack.c.b16 %v352, %v350
    %v477 = vpack.c.b16 %v355, %v353
    %v478 = vpack.c.b16 %v356, %v354
    %v479 = vpack.c.b16 %v359, %v357
    %v480 = vpack.c.b16 %v360, %v358
    %v481 = vpack.c.b16 %v363, %v361
    %v482 = vpack.c.b16 %v364, %v362
    %v483 = vpack.c.b16 %v367, %v365
    %v484 = vpack.c.b16 %v368, %v366
    %v485 = vpack.c.b16 %v371, %v369
    %v486 = vpack.c.b16 %v372, %v370
    %v487 = vpack.c.b16 %v375, %v373
    %v488 = vpack.c.b16 %v376, %v374
    %v489 = vpack.c.b16 %v379, %v377
    %v490 = vpack.c.b16 %v380, %v378
    %v491 = vpack.c.b16 %v383, %v381
    %v492 = vpack.c.b16 %v384, %v382
    %v493 = vpack.c.b16 %v387, %v385
    %v494 = vpack.c.b16 %v388, %v386
    %v495 = vpack.c.b16 %v391, %v389
    %v496 = vpack.c.b16 %v392, %v390
    %v497 = vpack.c.b16 %v395, %v393
    %v498 = vpack.c.b16 %v396, %v394
    %v499 = vpack.c.b16 %v399, %v397
    %v500 = vpack.c.b16 %v400, %v398
    %v501 = vpack.c.b16 %v403, %v401
    %v502 = vpack.c.b16 %v404, %v402
    %v503 = vpack.c.b16 %v407, %v405
    %v504 = vpack.c.b16 %v408, %v406
    %v505 = vpack.c.b16 %v411, %v409
    %v506 = vpack.c.b16 %v412, %v410
    %v507 = vpack.c.b16 %v415, %v413
    %v508 = vpack.c.b16 %v416, %v414
    %v509 = vpack.c.b16 %v419, %v417
    %v510 = vpack.c.b16 %v420, %v418
    %v511 = vpack.c.b16 %v423, %v421
    %v512 = vpack.c.b16 %v424, %v422
    %v513 = vpack.c.b16 %v427, %v425
    %v514 = vpack.c.b16 %v428, %v426
    %v515 = vpack.c.b16 %v431, %v429
    %v516 = vpack.c.b16 %v432, %v430
    %v517 = vpack.c.b16 %v435, %v433
    %v518 = vpack.c.b16 %v436, %v434
    %v519 = vpack.c.b16 %v439, %v437
    %v520 = vpack.c.b16 %v440, %v438
    %v521 = vpack.c.b16 %v443, %v441
    %v522 = vpack.c.b16 %v444, %v442
    %v523 = vpack.c.b16 %v447, %v445
    %v524 = vpack.c.b16 %v448, %v446
    %v525 = vpack.c.b16 %v451, %v449
    %v526 = vpack.c.b16 %v452, %v450
    %v527 = vpack.c.b16 %v455, %v453
    %v528 = vpack.c.b16 %v456, %v454
    %v529 = vpack.c.b16 %v459, %v457
    %v530 = vpack.c.b16 %v460, %v458
    %v531 = vpack.c.b16 %v463, %v461
    %v532 = vpack.c.b16 %v464, %v462
    %v533 = vpack.c.b16 %v467, %v465
    %v534 = vpack.c.b16 %v468, %v466
    %v535 = vpack.c.b16 %v471, %v469
    %v536 = vpack.c.b16 %v472, %v470
    %601 = vmatprep.subr.bf16.mxu0 %v474
    %602 = vmatpush1.bf16.msra.mxu0 %v473
    %603 = vmatprep.subr.bf16.mxu0 %v476
    %604 = vmatpush1.bf16.msra.mxu0 %v475
    %605 = vmatprep.subr.bf16.mxu0 %v478
    %606 = vmatpush1.bf16.msra.mxu0 %v477
    %607 = vmatprep.subr.bf16.mxu0 %v480
    %608 = vmatpush1.bf16.msra.mxu0 %v479
    %609 = vmatprep.subr.bf16.mxu0 %v482
    %610 = vmatpush1.bf16.msra.mxu0 %v481
    %611 = vmatprep.subr.bf16.mxu0 %v484
    %612 = vmatpush1.bf16.msra.mxu0 %v483
    %613 = vmatprep.subr.bf16.mxu0 %v486
    %614 = vmatpush1.bf16.msra.mxu0 %v485
    %615 = vmatprep.subr.bf16.mxu0 %v488
    %616 = vmatpush1.bf16.msra.mxu0 %v487
    %617 = vmatprep.subr.bf16.mxu0 %v490
    %618 = vmatpush1.bf16.msra.mxu0 %v489
    %619 = vmatprep.subr.bf16.mxu0 %v492
    %620 = vmatpush1.bf16.msra.mxu0 %v491
    %621 = vmatprep.subr.bf16.mxu0 %v494
    %622 = vmatpush1.bf16.msra.mxu0 %v493
    %623 = vmatprep.subr.bf16.mxu0 %v496
    %624 = vmatpush1.bf16.msra.mxu0 %v495
    %625 = vmatprep.subr.bf16.mxu0 %v498
    %626 = vmatpush1.bf16.msra.mxu0 %v497
    %627 = vmatprep.subr.bf16.mxu0 %v500
    %628 = vmatpush1.bf16.msra.mxu0 %v499
    %629 = vmatprep.subr.bf16.mxu0 %v502
    %630 = vmatpush1.bf16.msra.mxu0 %v501
    %631 = vmatprep.subr.bf16.mxu0 %v504
    %632 = vmatpush1.bf16.msra.mxu0 %v503
    %633 = vmatprep.mubr.bf16.mxu0 %v202
    %634 = vmatmul.mubr.bf16.gmra.mrb[0].mxu0 %v201
    %v635 = vpop.f32.mrb[0].mxu0
    %v636 = vadd.f32 %v274, %v635
    %v637 = vpop.f32.mrb[0].mxu0
    %v638 = vadd.f32 %v278, %v637
    %v639 = vpop.f32.mrb[0].mxu0
    %v640 = vpop.f32.mrb[0].mxu0
    %641 = vdwg.mxu0
    %642 = vmatprep.subr.bf16.mxu0 %v506
    %643 = vmatpush1.bf16.msra.mxu0 %v505
    %644 = vmatprep.subr.bf16.mxu0 %v508
    %645 = vmatpush1.bf16.msra.mxu0 %v507
    %646 = vmatprep.subr.bf16.mxu0 %v510
    %647 = vmatpush1.bf16.msra.mxu0 %v509
    %648 = vmatprep.subr.bf16.mxu0 %v512
    %649 = vmatpush1.bf16.msra.mxu0 %v511
    %650 = vmatprep.subr.bf16.mxu0 %v514
    %651 = vmatpush1.bf16.msra.mxu0 %v513
    %652 = vmatprep.subr.bf16.mxu0 %v516
    %653 = vmatpush1.bf16.msra.mxu0 %v515
    %654 = vmatprep.subr.bf16.mxu0 %v518
    %655 = vmatpush1.bf16.msra.mxu0 %v517
    %656 = vmatprep.subr.bf16.mxu0 %v520
    %657 = vmatpush1.bf16.msra.mxu0 %v519
    %658 = vmatprep.subr.bf16.mxu0 %v522
    %659 = vmatpush1.bf16.msra.mxu0 %v521
    %660 = vmatprep.subr.bf16.mxu0 %v524
    %661 = vmatpush1.bf16.msra.mxu0 %v523
    %662 = vmatprep.subr.bf16.mxu0 %v526
    %663 = vmatpush1.bf16.msra.mxu0 %v525
    %664 = vmatprep.subr.bf16.mxu0 %v528
    %665 = vmatpush1.bf16.msra.mxu0 %v527
    %666 = vmatprep.subr.bf16.mxu0 %v530
    %667 = vmatpush1.bf16.msra.mxu0 %v529
    %668 = vmatprep.subr.bf16.mxu0 %v532
    %669 = vmatpush1.bf16.msra.mxu0 %v531
    %670 = vmatprep.subr.bf16.mxu0 %v534
    %671 = vmatpush1.bf16.msra.mxu0 %v533
    %672 = vmatprep.subr.bf16.mxu0 %v536
    %673 = vmatpush1.bf16.msra.mxu0 %v535
    %674 = vmatprep.mubr.bf16.mxu0 %v204
    %675 = vmatmul.mubr.bf16.gmra.mrb[0].mxu0 %v203
    %v676 = vpop.f32.mrb[0].mxu0
    %v677 = vadd.f32 %v636, %v676
    %v678 = vpop.f32.mrb[0].mxu0
    %v679 = vadd.f32 %v638, %v678
    %v680 = vpop.f32.mrb[0].mxu0
    %v681 = vpop.f32.mrb[0].mxu0
    %682 = vdwg.mxu0
    %v683 = vmax.f32 %v677, 0.0
    %v684 = vmax.f32 %v679, 0.0
    %v685 = vpack.c.bf16 %v683, %v683
    %v686 = vpack.c.bf16 %v684, %v684
    %v687 = vld [vmem:[%s4] sm:$0xf]
    %v688 = vld [vmem:[%s4 + $0x4] sm:$0xf]
    %v689 = vld [vmem:[%s4 + $0x8] sm:$0xf]
    %v690 = vld [vmem:[%s4 + $0xc] sm:$0xf]
    %v691 = vld [vmem:[%s4 + $0x10] sm:$0xf]
    %v692 = vld [vmem:[%s4 + $0x14] sm:$0xf]
    %v693 = vld [vmem:[%s4 + $0x18] sm:$0xf]
    %v694 = vld [vmem:[%s4 + $0x1c] sm:$0xf]
    %v695 = vld [vmem:[%s4 + $0x20] sm:$0xf]
    %v696 = vld [vmem:[%s4 + $0x24] sm:$0xf]
    %v697 = vld [vmem:[%s4 + $0x28] sm:$0xf]
    %v698 = vld [vmem:[%s4 + $0x2c] sm:$0xf]
    %v699 = vld [vmem:[%s4 + $0x30] sm:$0xf]
    %v700 = vld [vmem:[%s4 + $0x34] sm:$0xf]
    %v701 = vld [vmem:[%s4 + $0x38] sm:$0xf]
    %v702 = vld [vmem:[%s4 + $0x3c] sm:$0xf]
    %v703 = vld [vmem:[%s4 + $0x40] sm:$0xf]
    %v704 = vld [vmem:[%s4 + $0x44] sm:$0xf]
    %v705 = vld [vmem:[%s4 + $0x48] sm:$0xf]
    %v706 = vld [vmem:[%s4 + $0x4c] sm:$0xf]
    %v707 = vld [vmem:[%s4 + $0x50] sm:$0xf]
    %v708 = vld [vmem:[%s4 + $0x54] sm:$0xf]
    %v709 = vld [vmem:[%s4 + $0x58] sm:$0xf]
    %v710 = vld [vmem:[%s4 + $0x5c] sm:$0xf]
    %v711 = vld [vmem:[%s4 + $0x60] sm:$0xf]
    %v712 = vld [vmem:[%s4 + $0x64] sm:$0xf]
    %v713 = vld [vmem:[%s4 + $0x68] sm:$0xf]
    %v714 = vld [vmem:[%s4 + $0x6c] sm:$0xf]
    %v715 = vld [vmem:[%s4 + $0x70] sm:$0xf]
    %v716 = vld [vmem:[%s4 + $0x74] sm:$0xf]
    %v717 = vld [vmem:[%s4 + $0x78] sm:$0xf]
    %v718 = vld [vmem:[%s4 + $0x7c] sm:$0xf]
    %v719 = vld [vmem:[%s5] sm:$0x1]
    %v721 = vlaneseq
    %v722 = vshrl.u32 %v721, 7
    %v723 = vsub.s32 0, %v722
    %v724 = vrot.slane %v719, %v723
    %v758 = vunpack.c.l.b16 %v687
    %v759 = vunpack.c.l.b16 %v688
    %v760 = vunpack.c.l.b16 %v689
    %v761 = vunpack.c.l.b16 %v690
    %v762 = vunpack.c.l.b16 %v691
    %v763 = vunpack.c.l.b16 %v692
    %v764 = vunpack.c.l.b16 %v693
    %v765 = vunpack.c.l.b16 %v694
    %v766 = vunpack.c.l.b16 %v695
    %v767 = vunpack.c.l.b16 %v696
    %v768 = vunpack.c.l.b16 %v697
    %v769 = vunpack.c.l.b16 %v698
    %v770 = vunpack.c.l.b16 %v699
    %v771 = vunpack.c.l.b16 %v700
    %v772 = vunpack.c.l.b16 %v701
    %v773 = vunpack.c.l.b16 %v702
    %v774 = vunpack.c.l.b16 %v703
    %v775 = vunpack.c.l.b16 %v704
    %v776 = vunpack.c.l.b16 %v705
    %v777 = vunpack.c.l.b16 %v706
    %v778 = vunpack.c.l.b16 %v707
    %v779 = vunpack.c.l.b16 %v708
    %v780 = vunpack.c.l.b16 %v709
    %v781 = vunpack.c.l.b16 %v710
    %v782 = vunpack.c.l.b16 %v711
    %v783 = vunpack.c.l.b16 %v712
    %v784 = vunpack.c.l.b16 %v713
    %v785 = vunpack.c.l.b16 %v714
    %v786 = vunpack.c.l.b16 %v715
    %v787 = vunpack.c.l.b16 %v716
    %v788 = vunpack.c.l.b16 %v717
    %v789 = vunpack.c.l.b16 %v718
    %v790 = vpack.c.b16 %v759, %v758
    %v791 = vpack.c.b16 %v761, %v760
    %v792 = vpack.c.b16 %v763, %v762
    %v793 = vpack.c.b16 %v765, %v764
    %v794 = vpack.c.b16 %v767, %v766
    %v795 = vpack.c.b16 %v769, %v768
    %v796 = vpack.c.b16 %v771, %v770
    %v797 = vpack.c.b16 %v773, %v772
    %v798 = vpack.c.b16 %v775, %v774
    %v799 = vpack.c.b16 %v777, %v776
    %v800 = vpack.c.b16 %v779, %v778
    %v801 = vpack.c.b16 %v781, %v780
    %v802 = vpack.c.b16 %v783, %v782
    %v803 = vpack.c.b16 %v785, %v784
    %v804 = vpack.c.b16 %v787, %v786
    %v805 = vpack.c.b16 %v789, %v788
    %822 = vmatprep.subr.bf16.mxu0 0
    %823 = vmatpush1.bf16.msra.mxu0 %v790
    %824 = vmatprep.subr.bf16.mxu0 0
    %825 = vmatpush1.bf16.msra.mxu0 %v791
    %826 = vmatprep.subr.bf16.mxu0 0
    %827 = vmatpush1.bf16.msra.mxu0 %v792
    %828 = vmatprep.subr.bf16.mxu0 0
    %829 = vmatpush1.bf16.msra.mxu0 %v793
    %830 = vmatprep.subr.bf16.mxu0 0
    %831 = vmatpush1.bf16.msra.mxu0 %v794
    %832 = vmatprep.subr.bf16.mxu0 0
    %833 = vmatpush1.bf16.msra.mxu0 %v795
    %834 = vmatprep.subr.bf16.mxu0 0
    %835 = vmatpush1.bf16.msra.mxu0 %v796
    %836 = vmatprep.subr.bf16.mxu0 0
    %837 = vmatpush1.bf16.msra.mxu0 %v797
    %838 = vmatprep.subr.bf16.mxu0 0
    %839 = vmatpush1.bf16.msra.mxu0 %v798
    %840 = vmatprep.subr.bf16.mxu0 0
    %841 = vmatpush1.bf16.msra.mxu0 %v799
    %842 = vmatprep.subr.bf16.mxu0 0
    %843 = vmatpush1.bf16.msra.mxu0 %v800
    %844 = vmatprep.subr.bf16.mxu0 0
    %845 = vmatpush1.bf16.msra.mxu0 %v801
    %846 = vmatprep.subr.bf16.mxu0 0
    %847 = vmatpush1.bf16.msra.mxu0 %v802
    %848 = vmatprep.subr.bf16.mxu0 0
    %849 = vmatpush1.bf16.msra.mxu0 %v803
    %850 = vmatprep.subr.bf16.mxu0 0
    %851 = vmatpush1.bf16.msra.mxu0 %v804
    %852 = vmatprep.subr.bf16.mxu0 0
    %853 = vmatpush1.bf16.msra.mxu0 %v805
    %854 = vmatprep.mubr.bf16.mxu0 %v686
    %855 = vmatmul.mubr.bf16.gmra.mrb[0].mxu0 %v685
    %v856 = vpop.f32.mrb[0].mxu0
    %v857 = vadd.f32 %v724, %v856
    %v858 = vpop.f32.mrb[0].mxu0
    %v859 = vpop.f32.mrb[0].mxu0
    %v860 = vpop.f32.mrb[0].mxu0
    %861 = vdwg.mxu0
    %v862 = vmax.f32 %v857, 0.0
    %v863 = vpack.c.bf16 %v862, %v862
    %v864 = vld [vmem:[#allocation10] sm:$0xf]
    %v865 = vld [vmem:[#allocation10 + $0x4] sm:$0xf]
    %v866 = vld [vmem:[#allocation10 + $0x8] sm:$0xf]
    %v867 = vld [vmem:[#allocation10 + $0xc] sm:$0xf]
    %v868 = vld [vmem:[#allocation10 + $0x10] sm:$0xf]
    %v869 = vld [vmem:[#allocation10 + $0x14] sm:$0xf]
    %v870 = vld [vmem:[#allocation10 + $0x18] sm:$0xf]
    %v871 = vld [vmem:[#allocation10 + $0x1c] sm:$0xf]
    %v872 = vld [vmem:[#allocation10 + $0x20] sm:$0xf]
    %v873 = vld [vmem:[#allocation10 + $0x24] sm:$0xf]
    %v874 = vld [vmem:[#allocation10 + $0x28] sm:$0xf]
    %v875 = vld [vmem:[#allocation10 + $0x2c] sm:$0xf]
    %v876 = vld [vmem:[#allocation10 + $0x30] sm:$0xf]
    %v877 = vld [vmem:[#allocation10 + $0x34] sm:$0xf]
    %v878 = vld [vmem:[#allocation10 + $0x38] sm:$0xf]
    %v879 = vld [vmem:[#allocation10 + $0x3c] sm:$0xf]
    %v880 = vld [vmem:[#allocation11] sm:$0x1]
    %v882 = vlaneseq
    %v883 = vshrl.u32 %v882, 7
    %v884 = vsub.s32 0, %v883
    %v885 = vrot.slane %v880, %v884
    %v903 = vunpack.c.l.b16 %v864
    %v904 = vunpack.c.l.b16 %v865
    %v905 = vunpack.c.l.b16 %v866
    %v906 = vunpack.c.l.b16 %v867
    %v907 = vunpack.c.l.b16 %v868
    %v908 = vunpack.c.l.b16 %v869
    %v909 = vunpack.c.l.b16 %v870
    %v910 = vunpack.c.l.b16 %v871
    %v911 = vunpack.c.l.b16 %v872
    %v912 = vunpack.c.l.b16 %v873
    %v913 = vunpack.c.l.b16 %v874
    %v914 = vunpack.c.l.b16 %v875
    %v915 = vunpack.c.l.b16 %v876
    %v916 = vunpack.c.l.b16 %v877
    %v917 = vunpack.c.l.b16 %v878
    %v918 = vunpack.c.l.b16 %v879
    %v919 = vpack.c.b16 %v904, %v903
    %v920 = vpack.c.b16 %v906, %v905
    %v921 = vpack.c.b16 %v908, %v907
    %v922 = vpack.c.b16 %v910, %v909
    %v923 = vpack.c.b16 %v912, %v911
    %v924 = vpack.c.b16 %v914, %v913
    %v925 = vpack.c.b16 %v916, %v915
    %v926 = vpack.c.b16 %v918, %v917
    %935 = vmatprep.subr.bf16.mxu0 0
    %936 = vmatpush1.bf16.msra.mxu0 %v919
    %937 = vmatprep.subr.bf16.mxu0 0
    %938 = vmatpush1.bf16.msra.mxu0 %v920
    %939 = vmatprep.subr.bf16.mxu0 0
    %940 = vmatpush1.bf16.msra.mxu0 %v921
    %941 = vmatprep.subr.bf16.mxu0 0
    %942 = vmatpush1.bf16.msra.mxu0 %v922
    %943 = vmatprep.subr.bf16.mxu0 0
    %944 = vmatpush1.bf16.msra.mxu0 %v923
    %945 = vmatprep.subr.bf16.mxu0 0
    %946 = vmatpush1.bf16.msra.mxu0 %v924
    %947 = vmatprep.subr.bf16.mxu0 0
    %948 = vmatpush1.bf16.msra.mxu0 %v925
    %949 = vmatprep.subr.bf16.mxu0 0
    %950 = vmatpush1.bf16.msra.mxu0 %v926
    %951 = vmatprep.subr.bf16.mxu0 0
    %952 = vmatpush1.bf16.msra.mxu0 0
    %953 = vmatprep.subr.bf16.mxu0 0
    %954 = vmatpush1.bf16.msra.mxu0 0
    %955 = vmatprep.subr.bf16.mxu0 0
    %956 = vmatpush1.bf16.msra.mxu0 0
    %957 = vmatprep.subr.bf16.mxu0 0
    %958 = vmatpush1.bf16.msra.mxu0 0
    %959 = vmatprep.subr.bf16.mxu0 0
    %960 = vmatpush1.bf16.msra.mxu0 0
    %961 = vmatprep.subr.bf16.mxu0 0
    %962 = vmatpush1.bf16.msra.mxu0 0
    %963 = vmatprep.subr.bf16.mxu0 0
    %964 = vmatpush1.bf16.msra.mxu0 0
    %965 = vmatprep.subr.bf16.mxu0 0
    %966 = vmatpush1.bf16.msra.mxu0 0
    %967 = vmatprep.mubr.bf16.mxu0 0
    %968 = vmatmul.mubr.bf16.gmra.mrb[0].mxu0 %v863
    %v969 = vpop.f32.mrb[0].mxu0
    %v970 = vadd.f32 %v885, %v969
    %v971 = vpop.f32.mrb[0].mxu0
    %v972 = vpop.f32.mrb[0].mxu0
    %v973 = vpop.f32.mrb[0].mxu0
    %974 = vdwg.mxu0
    %v975 = vmax.f32 %v970, 0.0
    %v976 = vpack.c.bf16 %v975, %v975
    %v977 = vld [vmem:[%s8] sm:$0xf]
    %v978 = vld [vmem:[%s8 + $0x4] sm:$0xf]
    %v979 = vld [vmem:[%s8 + $0x8] sm:$0xf]
    %v980 = vld [vmem:[%s8 + $0xc] sm:$0xf]
    %v981 = vld [vmem:[%s8 + $0x10] sm:$0xf]
    %v982 = vld [vmem:[%s8 + $0x14] sm:$0xf]
    %v983 = vld [vmem:[%s8 + $0x18] sm:$0xf]
    %v984 = vld [vmem:[%s8 + $0x1c] sm:$0xf]
    %v985 = vld [vmem:[%s8 + $0x20] sm:$0xf]
    %v986 = vld [vmem:[%s8 + $0x24] sm:$0xf]
    %v987 = vld [vmem:[%s8 + $0x28] sm:$0xf]
    %v988 = vld [vmem:[%s8 + $0x2c] sm:$0xf]
    %v989 = vld [vmem:[%s8 + $0x30] sm:$0xf]
    %v990 = vld [vmem:[%s8 + $0x34] sm:$0xf]
    %v991 = vld [vmem:[%s8 + $0x38] sm:$0xf]
    %v992 = vld [vmem:[%s8 + $0x3c] sm:$0xf]
    %v993 = vld [vmem:[#allocation13] sm:$0x1]
    %v995 = vlaneseq
    %v996 = vshrl.u32 %v995, 7
    %v997 = vsub.s32 0, %v996
    %v998 = vrot.slane %v993, %v997
    %v1016 = vunpack.c.l.b16 %v977
    %v1017 = vunpack.c.l.b16 %v978
    %v1018 = vunpack.c.l.b16 %v979
    %v1019 = vunpack.c.l.b16 %v980
    %v1020 = vunpack.c.l.b16 %v981
    %v1021 = vunpack.c.l.b16 %v982
    %v1022 = vunpack.c.l.b16 %v983
    %v1023 = vunpack.c.l.b16 %v984
    %v1024 = vunpack.c.l.b16 %v985
    %v1025 = vunpack.c.l.b16 %v986
    %v1026 = vunpack.c.l.b16 %v987
    %v1027 = vunpack.c.l.b16 %v988
    %v1028 = vunpack.c.l.b16 %v989
    %v1029 = vunpack.c.l.b16 %v990
    %v1030 = vunpack.c.l.b16 %v991
    %v1031 = vunpack.c.l.b16 %v992
    %v1032 = vpack.c.b16 %v1017, %v1016
    %v1033 = vpack.c.b16 %v1019, %v1018
    %v1034 = vpack.c.b16 %v1021, %v1020
    %v1035 = vpack.c.b16 %v1023, %v1022
    %v1036 = vpack.c.b16 %v1025, %v1024
    %v1037 = vpack.c.b16 %v1027, %v1026
    %v1038 = vpack.c.b16 %v1029, %v1028
    %v1039 = vpack.c.b16 %v1031, %v1030
    %1048 = vmatprep.subr.bf16.mxu0 0
    %1049 = vmatpush1.bf16.msra.mxu0 %v1032
    %1050 = vmatprep.subr.bf16.mxu0 0
    %1051 = vmatpush1.bf16.msra.mxu0 %v1033
    %1052 = vmatprep.subr.bf16.mxu0 0
    %1053 = vmatpush1.bf16.msra.mxu0 %v1034
    %1054 = vmatprep.subr.bf16.mxu0 0
    %1055 = vmatpush1.bf16.msra.mxu0 %v1035
    %1056 = vmatprep.subr.bf16.mxu0 0
    %1057 = vmatpush1.bf16.msra.mxu0 %v1036
    %1058 = vmatprep.subr.bf16.mxu0 0
    %1059 = vmatpush1.bf16.msra.mxu0 %v1037
    %1060 = vmatprep.subr.bf16.mxu0 0
    %1061 = vmatpush1.bf16.msra.mxu0 %v1038
    %1062 = vmatprep.subr.bf16.mxu0 0
    %1063 = vmatpush1.bf16.msra.mxu0 %v1039
    %1064 = vmatprep.subr.bf16.mxu0 0
    %1065 = vmatpush1.bf16.msra.mxu0 0
    %1066 = vmatprep.subr.bf16.mxu0 0
    %1067 = vmatpush1.bf16.msra.mxu0 0
    %1068 = vmatprep.subr.bf16.mxu0 0
    %1069 = vmatpush1.bf16.msra.mxu0 0
    %1070 = vmatprep.subr.bf16.mxu0 0
    %1071 = vmatpush1.bf16.msra.mxu0 0
    %1072 = vmatprep.subr.bf16.mxu0 0
    %1073 = vmatpush1.bf16.msra.mxu0 0
    %1074 = vmatprep.subr.bf16.mxu0 0
    %1075 = vmatpush1.bf16.msra.mxu0 0
    %1076 = vmatprep.subr.bf16.mxu0 0
    %1077 = vmatpush1.bf16.msra.mxu0 0
    %1078 = vmatprep.subr.bf16.mxu0 0
    %1079 = vmatpush1.bf16.msra.mxu0 0
    %1080 = vmatprep.mubr.bf16.mxu0 0
    %1081 = vmatmul.mubr.bf16.gmra.mrb[0].mxu0 %v976
    %v1082 = vpop.f32.mrb[0].mxu0
    %v1083 = vadd.f32 %v998, %v1082
    %v1084 = vpop.f32.mrb[0].mxu0
    %v1085 = vpop.f32.mrb[0].mxu0
    %v1086 = vpop.f32.mrb[0].mxu0
    %1087 = vdwg.mxu0
    %v1088 = vld [vmem:[%s10] sm:$0xf]
    %v1089 = vld [vmem:[%s10 + $0x4] sm:$0xf]
    %v1090 = vld [vmem:[%s10 + $0x8] sm:$0xf]
    %v1091 = vld [vmem:[%s10 + $0xc] sm:$0xf]
    %v1092 = vld [vmem:[%s10 + $0x10] sm:$0xf]
    %v1093 = vld [vmem:[%s10 + $0x14] sm:$0xf]
    %v1094 = vld [vmem:[%s10 + $0x18] sm:$0xf]
    %v1095 = vld [vmem:[%s10 + $0x1c] sm:$0xf]
    %v1096 = vld [vmem:[%s10 + $0x20] sm:$0xf]
    %v1097 = vld [vmem:[%s10 + $0x24] sm:$0xf]
    %v1098 = vld [vmem:[%s10 + $0x28] sm:$0xf]
    %v1099 = vld [vmem:[%s10 + $0x2c] sm:$0xf]
    %v1100 = vld [vmem:[%s10 + $0x30] sm:$0xf]
    %v1101 = vld [vmem:[%s10 + $0x34] sm:$0xf]
    %v1102 = vld [vmem:[%s10 + $0x38] sm:$0xf]
    %v1103 = vld [vmem:[%s10 + $0x3c] sm:$0xf]
    %v1104 = vld [vmem:[%s11] sm:$0x1]
    %v1106 = vlaneseq
    %v1107 = vshrl.u32 %v1106, 7
    %v1108 = vsub.s32 0, %v1107
    %v1109 = vrot.slane %v1104, %v1108
    %v1127 = vunpack.c.l.b16 %v1088
    %v1128 = vunpack.c.l.b16 %v1089
    %v1129 = vunpack.c.l.b16 %v1090
    %v1130 = vunpack.c.l.b16 %v1091
    %v1131 = vunpack.c.l.b16 %v1092
    %v1132 = vunpack.c.l.b16 %v1093
    %v1133 = vunpack.c.l.b16 %v1094
    %v1134 = vunpack.c.l.b16 %v1095
    %v1135 = vunpack.c.l.b16 %v1096
    %v1136 = vunpack.c.l.b16 %v1097
    %v1137 = vunpack.c.l.b16 %v1098
    %v1138 = vunpack.c.l.b16 %v1099
    %v1139 = vunpack.c.l.b16 %v1100
    %v1140 = vunpack.c.l.b16 %v1101
    %v1141 = vunpack.c.l.b16 %v1102
    %v1142 = vunpack.c.l.b16 %v1103
    %v1143 = vpack.c.b16 %v1128, %v1127
    %v1144 = vpack.c.b16 %v1130, %v1129
    %v1145 = vpack.c.b16 %v1132, %v1131
    %v1146 = vpack.c.b16 %v1134, %v1133
    %v1147 = vpack.c.b16 %v1136, %v1135
    %v1148 = vpack.c.b16 %v1138, %v1137
    %v1149 = vpack.c.b16 %v1140, %v1139
    %v1150 = vpack.c.b16 %v1142, %v1141
    %1159 = vmatprep.subr.bf16.mxu0 0
    %1160 = vmatpush1.bf16.msra.mxu0 %v1143
    %1161 = vmatprep.subr.bf16.mxu0 0
    %1162 = vmatpush1.bf16.msra.mxu0 %v1144
    %1163 = vmatprep.subr.bf16.mxu0 0
    %1164 = vmatpush1.bf16.msra.mxu0 %v1145
    %1165 = vmatprep.subr.bf16.mxu0 0
    %1166 = vmatpush1.bf16.msra.mxu0 %v1146
    %1167 = vmatprep.subr.bf16.mxu0 0
    %1168 = vmatpush1.bf16.msra.mxu0 %v1147
    %1169 = vmatprep.subr.bf16.mxu0 0
    %1170 = vmatpush1.bf16.msra.mxu0 %v1148
    %1171 = vmatprep.subr.bf16.mxu0 0
    %1172 = vmatpush1.bf16.msra.mxu0 %v1149
    %1173 = vmatprep.subr.bf16.mxu0 0
    %1174 = vmatpush1.bf16.msra.mxu0 %v1150
    %1175 = vmatprep.subr.bf16.mxu0 0
    %1176 = vmatpush1.bf16.msra.mxu0 0
    %1177 = vmatprep.subr.bf16.mxu0 0
    %1178 = vmatpush1.bf16.msra.mxu0 0
    %1179 = vmatprep.subr.bf16.mxu0 0
    %1180 = vmatpush1.bf16.msra.mxu0 0
    %1181 = vmatprep.subr.bf16.mxu0 0
    %1182 = vmatpush1.bf16.msra.mxu0 0
    %1183 = vmatprep.subr.bf16.mxu0 0
    %1184 = vmatpush1.bf16.msra.mxu0 0
    %1185 = vmatprep.subr.bf16.mxu0 0
    %1186 = vmatpush1.bf16.msra.mxu0 0
    %1187 = vmatprep.subr.bf16.mxu0 0
    %1188 = vmatpush1.bf16.msra.mxu0 0
    %1189 = vmatprep.subr.bf16.mxu0 0
    %1190 = vmatpush1.bf16.msra.mxu0 0
    %1191 = vmatprep.mubr.bf16.mxu0 0
    %1192 = vmatmul.mubr.bf16.gmra.mrb[0].mxu0 %v976
    %v1193 = vpop.f32.mrb[0].mxu0
    %v1194 = vadd.f32 %v1109, %v1193
    %v1195 = vpop.f32.mrb[0].mxu0
    %v1196 = vpop.f32.mrb[0].mxu0
    %v1197 = vpop.f32.mrb[0].mxu0
    %1198 = vdwg.mxu0
    %v1199 = vld [vmem:[#allocation5] sm:$0xff]
    %v1200 = vmul.f32 %v1194, %v1199
    %v1201 = vadd.f32 %v1083, %v1200
    %v1202 = vpack.c.bf16 %v1201, %v1201
    %v1203 = vld [vmem:[#allocation14] sm:$0xf]
    %v1204 = vld [vmem:[#allocation14 + $0x4] sm:$0xf]
    %v1205 = vld [vmem:[#allocation14 + $0x8] sm:$0xf]
    %v1206 = vld [vmem:[#allocation14 + $0xc] sm:$0xf]
    %v1207 = vld [vmem:[%s13] sm:$0x1]
    %v1209 = vlaneseq
    %v1210 = vshrl.u32 %v1209, 7
    %v1211 = vsub.s32 0, %v1210
    %v1212 = vrot.slane %v1207, %v1211
    %v1218 = vunpack.c.l.b16 %v1203
    %v1219 = vunpack.c.l.b16 %v1204
    %v1220 = vunpack.c.l.b16 %v1205
    %v1221 = vunpack.c.l.b16 %v1206
    %v1222 = vpack.c.b16 %v1219, %v1218
    %v1223 = vpack.c.b16 %v1221, %v1220
    %vm1226 = vcmask 261120
    %v1228 = vsel %vm1226, %v1202, 0
    %1230 = vmatprep.subr.bf16.mxu0 0
    %1231 = vmatpush1.bf16.msra.mxu0 %v1222
    %1232 = vmatprep.subr.bf16.mxu0 0
    %1233 = vmatpush1.bf16.msra.mxu0 %v1223
    %1234 = vmatprep.subr.bf16.mxu0 0
    %1235 = vmatpush1.bf16.msra.mxu0 0
    %1236 = vmatprep.subr.bf16.mxu0 0
    %1237 = vmatpush1.bf16.msra.mxu0 0
    %1238 = vmatprep.subr.bf16.mxu0 0
    %1239 = vmatpush1.bf16.msra.mxu0 0
    %1240 = vmatprep.subr.bf16.mxu0 0
    %1241 = vmatpush1.bf16.msra.mxu0 0
    %1242 = vmatprep.subr.bf16.mxu0 0
    %1243 = vmatpush1.bf16.msra.mxu0 0
    %1244 = vmatprep.subr.bf16.mxu0 0
    %1245 = vmatpush1.bf16.msra.mxu0 0
    %1246 = vmatprep.subr.bf16.mxu0 0
    %1247 = vmatpush1.bf16.msra.mxu0 0
    %1248 = vmatprep.subr.bf16.mxu0 0
    %1249 = vmatpush1.bf16.msra.mxu0 0
    %1250 = vmatprep.subr.bf16.mxu0 0
    %1251 = vmatpush1.bf16.msra.mxu0 0
    %1252 = vmatprep.subr.bf16.mxu0 0
    %1253 = vmatpush1.bf16.msra.mxu0 0
    %1254 = vmatprep.subr.bf16.mxu0 0
    %1255 = vmatpush1.bf16.msra.mxu0 0
    %1256 = vmatprep.subr.bf16.mxu0 0
    %1257 = vmatpush1.bf16.msra.mxu0 0
    %1258 = vmatprep.subr.bf16.mxu0 0
    %1259 = vmatpush1.bf16.msra.mxu0 0
    %1260 = vmatprep.subr.bf16.mxu0 0
    %1261 = vmatpush1.bf16.msra.mxu0 0
    %1262 = vmatprep.mubr.bf16.mxu0 0
    %1263 = vmatmul.mubr.bf16.gmra.mrb[0].mxu0 %v1228
    %v1264 = vpop.f32.mrb[0].mxu0
    %v1265 = vadd.f32 %v1212, %v1264
    %v1266 = vpop.f32.mrb[0].mxu0
    %v1267 = vpop.f32.mrb[0].mxu0
    %v1268 = vpop.f32.mrb[0].mxu0
    %1269 = vdwg.mxu0
    %v1270 = vmax.f32 %v1265, 0.0
    %v1271 = vpack.c.bf16 %v1270, %v1270
    %v1272 = vld [vmem:[%s14] sm:$0xf]
    %v1273 = vld [vmem:[%s14 + $0x4] sm:$0xf]
    %v1274 = vld [vmem:[%s14 + $0x8] sm:$0xf]
    %v1275 = vld [vmem:[%s14 + $0xc] sm:$0xf]
    %v1276 = vld [vmem:[%s14 + $0x10] sm:$0xf]
    %v1277 = vld [vmem:[%s14 + $0x14] sm:$0xf]
    %v1278 = vld [vmem:[%s14 + $0x18] sm:$0xf]
    %v1279 = vld [vmem:[%s14 + $0x1c] sm:$0xf]
    %v1280 = vld [vmem:[%s14 + $0x20] sm:$0xf]
    %v1281 = vld [vmem:[%s14 + $0x24] sm:$0xf]
    %v1282 = vld [vmem:[%s14 + $0x28] sm:$0xf]
    %v1283 = vld [vmem:[%s14 + $0x2c] sm:$0xf]
    %v1284 = vld [vmem:[%s14 + $0x30] sm:$0xf]
    %v1285 = vld [vmem:[%s14 + $0x34] sm:$0xf]
    %v1286 = vld [vmem:[%s14 + $0x38] sm:$0xf]
    %v1287 = vld [vmem:[%s14 + $0x3c] sm:$0xf]
    %v1288 = vld [vmem:[%s15] sm:$0x1]
    %v1290 = vlaneseq
    %v1291 = vshrl.u32 %v1290, 7
    %v1292 = vsub.s32 0, %v1291
    %v1293 = vrot.slane %v1288, %v1292
    %v1311 = vunpack.c.l.b16 %v1272
    %v1312 = vunpack.c.l.b16 %v1273
    %v1313 = vunpack.c.l.b16 %v1274
    %v1314 = vunpack.c.l.b16 %v1275
    %v1315 = vunpack.c.l.b16 %v1276
    %v1316 = vunpack.c.l.b16 %v1277
    %v1317 = vunpack.c.l.b16 %v1278
    %v1318 = vunpack.c.l.b16 %v1279
    %v1319 = vunpack.c.l.b16 %v1280
    %v1320 = vunpack.c.l.b16 %v1281
    %v1321 = vunpack.c.l.b16 %v1282
    %v1322 = vunpack.c.l.b16 %v1283
    %v1323 = vunpack.c.l.b16 %v1284
    %v1324 = vunpack.c.l.b16 %v1285
    %v1325 = vunpack.c.l.b16 %v1286
    %v1326 = vunpack.c.l.b16 %v1287
    %v1327 = vpack.c.b16 %v1312, %v1311
    %v1328 = vpack.c.b16 %v1314, %v1313
    %v1329 = vpack.c.b16 %v1316, %v1315
    %v1330 = vpack.c.b16 %v1318, %v1317
    %v1331 = vpack.c.b16 %v1320, %v1319
    %v1332 = vpack.c.b16 %v1322, %v1321
    %v1333 = vpack.c.b16 %v1324, %v1323
    %v1334 = vpack.c.b16 %v1326, %v1325
    %1343 = vmatprep.subr.bf16.mxu0 0
    %1344 = vmatpush1.bf16.msra.mxu0 %v1327
    %1345 = vmatprep.subr.bf16.mxu0 0
    %1346 = vmatpush1.bf16.msra.mxu0 %v1328
    %1347 = vmatprep.subr.bf16.mxu0 0
    %1348 = vmatpush1.bf16.msra.mxu0 %v1329
    %1349 = vmatprep.subr.bf16.mxu0 0
    %1350 = vmatpush1.bf16.msra.mxu0 %v1330
    %1351 = vmatprep.subr.bf16.mxu0 0
    %1352 = vmatpush1.bf16.msra.mxu0 %v1331
    %1353 = vmatprep.subr.bf16.mxu0 0
    %1354 = vmatpush1.bf16.msra.mxu0 %v1332
    %1355 = vmatprep.subr.bf16.mxu0 0
    %1356 = vmatpush1.bf16.msra.mxu0 %v1333
    %1357 = vmatprep.subr.bf16.mxu0 0
    %1358 = vmatpush1.bf16.msra.mxu0 %v1334
    %1359 = vmatprep.subr.bf16.mxu0 0
    %1360 = vmatpush1.bf16.msra.mxu0 0
    %1361 = vmatprep.subr.bf16.mxu0 0
    %1362 = vmatpush1.bf16.msra.mxu0 0
    %1363 = vmatprep.subr.bf16.mxu0 0
    %1364 = vmatpush1.bf16.msra.mxu0 0
    %1365 = vmatprep.subr.bf16.mxu0 0
    %1366 = vmatpush1.bf16.msra.mxu0 0
    %1367 = vmatprep.subr.bf16.mxu0 0
    %1368 = vmatpush1.bf16.msra.mxu0 0
    %1369 = vmatprep.subr.bf16.mxu0 0
    %1370 = vmatpush1.bf16.msra.mxu0 0
    %1371 = vmatprep.subr.bf16.mxu0 0
    %1372 = vmatpush1.bf16.msra.mxu0 0
    %1373 = vmatprep.subr.bf16.mxu0 0
    %1374 = vmatpush1.bf16.msra.mxu0 0
    %1375 = vmatprep.mubr.bf16.mxu0 0
    %1376 = vmatmul.mubr.bf16.gmra.mrb[0].mxu0 %v1271
    %v1377 = vpop.f32.mrb[0].mxu0
    %v1378 = vadd.f32 %v1293, %v1377
    %v1379 = vpop.f32.mrb[0].mxu0
    %v1380 = vpop.f32.mrb[0].mxu0
    %v1381 = vpop.f32.mrb[0].mxu0
    %1382 = vdwg.mxu0
    %v1383 = vmax.f32 %v1378, 0.0
    %v1384 = vpack.c.bf16 %v1383, %v1383
    %v1385 = vld [vmem:[#allocation16] sm:$0xff]
    %v1386 = vld [vmem:[#allocation16 + $0x8] sm:$0xff]
    %v1387 = vld [vmem:[#allocation16 + $0x10] sm:$0xff]
    %v1388 = vld [vmem:[#allocation16 + $0x18] sm:$0xff]
    %v1389 = vld [vmem:[#allocation16 + $0x20] sm:$0xff]
    %v1390 = vld [vmem:[#allocation16 + $0x28] sm:$0xff]
    %v1391 = vld [vmem:[#allocation16 + $0x30] sm:$0xff]
    %v1392 = vld [vmem:[#allocation16 + $0x38] sm:$0xff]
    %v1393 = vld [vmem:[#allocation16 + $0x40] sm:$0xff]
    %v1394 = vld [vmem:[#allocation16 + $0x48] sm:$0xff]
    %v1395 = vld [vmem:[#allocation16 + $0x50] sm:$0xff]
    %v1396 = vld [vmem:[#allocation16 + $0x58] sm:$0xff]
    %v1397 = vld [vmem:[#allocation16 + $0x60] sm:$0xff]
    %v1398 = vld [vmem:[#allocation16 + $0x68] sm:$0xff]
    %v1399 = vld [vmem:[#allocation16 + $0x70] sm:$0xff]
    %v1400 = vld [vmem:[#allocation16 + $0x78] sm:$0xff]
    %v1401 = vld [vmem:[%s17] sm:$0x3]
    %v1403 = vlaneseq
    %v1404 = vshrl.u32 %v1403, 7
    %v1405 = vsub.s32 0, %v1404
    %v1406 = vrot.slane %v1401, %v1405
    %v1407 = vlaneseq
    %v1408 = vshrl.u32 %v1407, 7
    %v1409 = vsub.s32 1, %v1408
    %v1410 = vrot.slane %v1401, %v1409
    %v1429 = vunpack.c.l.b16 %v1385
    %v1430 = vunpack.c.h.b16 %v1385
    %v1431 = vunpack.c.l.b16 %v1386
    %v1432 = vunpack.c.h.b16 %v1386
    %v1433 = vunpack.c.l.b16 %v1387
    %v1434 = vunpack.c.h.b16 %v1387
    %v1435 = vunpack.c.l.b16 %v1388
    %v1436 = vunpack.c.h.b16 %v1388
    %v1437 = vunpack.c.l.b16 %v1389
    %v1438 = vunpack.c.h.b16 %v1389
    %v1439 = vunpack.c.l.b16 %v1390
    %v1440 = vunpack.c.h.b16 %v1390
    %v1441 = vunpack.c.l.b16 %v1391
    %v1442 = vunpack.c.h.b16 %v1391
    %v1443 = vunpack.c.l.b16 %v1392
    %v1444 = vunpack.c.h.b16 %v1392
    %v1445 = vunpack.c.l.b16 %v1393
    %v1446 = vunpack.c.h.b16 %v1393
    %v1447 = vunpack.c.l.b16 %v1394
    %v1448 = vunpack.c.h.b16 %v1394
    %v1449 = vunpack.c.l.b16 %v1395
    %v1450 = vunpack.c.h.b16 %v1395
    %v1451 = vunpack.c.l.b16 %v1396
    %v1452 = vunpack.c.h.b16 %v1396
    %v1453 = vunpack.c.l.b16 %v1397
    %v1454 = vunpack.c.h.b16 %v1397
    %v1455 = vunpack.c.l.b16 %v1398
    %v1456 = vunpack.c.h.b16 %v1398
    %v1457 = vunpack.c.l.b16 %v1399
    %v1458 = vunpack.c.h.b16 %v1399
    %v1459 = vunpack.c.l.b16 %v1400
    %v1460 = vunpack.c.h.b16 %v1400
    %v1461 = vpack.c.b16 %v1431, %v1429
    %v1462 = vpack.c.b16 %v1432, %v1430
    %v1463 = vpack.c.b16 %v1435, %v1433
    %v1464 = vpack.c.b16 %v1436, %v1434
    %v1465 = vpack.c.b16 %v1439, %v1437
    %v1466 = vpack.c.b16 %v1440, %v1438
    %v1467 = vpack.c.b16 %v1443, %v1441
    %v1468 = vpack.c.b16 %v1444, %v1442
    %v1469 = vpack.c.b16 %v1447, %v1445
    %v1470 = vpack.c.b16 %v1448, %v1446
    %v1471 = vpack.c.b16 %v1451, %v1449
    %v1472 = vpack.c.b16 %v1452, %v1450
    %v1473 = vpack.c.b16 %v1455, %v1453
    %v1474 = vpack.c.b16 %v1456, %v1454
    %v1475 = vpack.c.b16 %v1459, %v1457
    %v1476 = vpack.c.b16 %v1460, %v1458
    %1493 = vmatprep.subr.bf16.mxu0 %v1462
    %1494 = vmatpush1.bf16.msra.mxu0 %v1461
    %1495 = vmatprep.subr.bf16.mxu0 %v1464
    %1496 = vmatpush1.bf16.msra.mxu0 %v1463
    %1497 = vmatprep.subr.bf16.mxu0 %v1466
    %1498 = vmatpush1.bf16.msra.mxu0 %v1465
    %1499 = vmatprep.subr.bf16.mxu0 %v1468
    %1500 = vmatpush1.bf16.msra.mxu0 %v1467
    %1501 = vmatprep.subr.bf16.mxu0 %v1470
    %1502 = vmatpush1.bf16.msra.mxu0 %v1469
    %1503 = vmatprep.subr.bf16.mxu0 %v1472
    %1504 = vmatpush1.bf16.msra.mxu0 %v1471
    %1505 = vmatprep.subr.bf16.mxu0 %v1474
    %1506 = vmatpush1.bf16.msra.mxu0 %v1473
    %1507 = vmatprep.subr.bf16.mxu0 %v1476
    %1508 = vmatpush1.bf16.msra.mxu0 %v1475
    %1509 = vmatprep.subr.bf16.mxu0 0
    %1510 = vmatpush1.bf16.msra.mxu0 0
    %1511 = vmatprep.subr.bf16.mxu0 0
    %1512 = vmatpush1.bf16.msra.mxu0 0
    %1513 = vmatprep.subr.bf16.mxu0 0
    %1514 = vmatpush1.bf16.msra.mxu0 0
    %1515 = vmatprep.subr.bf16.mxu0 0
    %1516 = vmatpush1.bf16.msra.mxu0 0
    %1517 = vmatprep.subr.bf16.mxu0 0
    %1518 = vmatpush1.bf16.msra.mxu0 0
    %1519 = vmatprep.subr.bf16.mxu0 0
    %1520 = vmatpush1.bf16.msra.mxu0 0
    %1521 = vmatprep.subr.bf16.mxu0 0
    %1522 = vmatpush1.bf16.msra.mxu0 0
    %1523 = vmatprep.subr.bf16.mxu0 0
    %1524 = vmatpush1.bf16.msra.mxu0 0
    %1525 = vmatprep.mubr.bf16.mxu0 0
    %1526 = vmatmul.mubr.bf16.gmra.mrb[0].mxu0 %v1384
    %v1527 = vpop.f32.mrb[0].mxu0
    %v1528 = vadd.f32 %v1406, %v1527
    %v1529 = vpop.f32.mrb[0].mxu0
    %v1530 = vadd.f32 %v1410, %v1529
    %v1531 = vpop.f32.mrb[0].mxu0
    %v1532 = vpop.f32.mrb[0].mxu0
    %1533 = vdwg.mxu0
    %v1534 = vmax.f32 %v1528, 0.0
    %v1535 = vmax.f32 %v1530, 0.0
    %v1536 = vpack.c.bf16 %v1534, %v1534
    %v1537 = vpack.c.bf16 %v1535, %v1535
    %v1538 = vld [vmem:[#allocation17] sm:$0xff]
    %v1539 = vld [vmem:[#allocation17 + $0x8] sm:$0xff]
    %v1540 = vld [vmem:[#allocation17 + $0x10] sm:$0xff]
    %v1541 = vld [vmem:[#allocation17 + $0x18] sm:$0xff]
    %v1542 = vld [vmem:[#allocation17 + $0x20] sm:$0xff]
    %v1543 = vld [vmem:[#allocation17 + $0x28] sm:$0xff]
    %v1544 = vld [vmem:[#allocation17 + $0x30] sm:$0xff]
    %v1545 = vld [vmem:[#allocation17 + $0x38] sm:$0xff]
    %v1546 = vld [vmem:[#allocation17 + $0x40] sm:$0xff]
    %v1547 = vld [vmem:[#allocation17 + $0x48] sm:$0xff]
    %v1548 = vld [vmem:[#allocation17 + $0x50] sm:$0xff]
    %v1549 = vld [vmem:[#allocation17 + $0x58] sm:$0xff]
    %v1550 = vld [vmem:[#allocation17 + $0x60] sm:$0xff]
    %v1551 = vld [vmem:[#allocation17 + $0x68] sm:$0xff]
    %v1552 = vld [vmem:[#allocation17 + $0x70] sm:$0xff]
    %v1553 = vld [vmem:[#allocation17 + $0x78] sm:$0xff]
    %v1554 = vld [vmem:[#allocation17 + $0x80] sm:$0xff]
    %v1555 = vld [vmem:[#allocation17 + $0x88] sm:$0xff]
    %v1556 = vld [vmem:[#allocation17 + $0x90] sm:$0xff]
    %v1557 = vld [vmem:[#allocation17 + $0x98] sm:$0xff]
    %v1558 = vld [vmem:[#allocation17 + $0xa0] sm:$0xff]
    %v1559 = vld [vmem:[#allocation17 + $0xa8] sm:$0xff]
    %v1560 = vld [vmem:[#allocation17 + $0xb0] sm:$0xff]
    %v1561 = vld [vmem:[#allocation17 + $0xb8] sm:$0xff]
    %v1562 = vld [vmem:[#allocation17 + $0xc0] sm:$0xff]
    %v1563 = vld [vmem:[#allocation17 + $0xc8] sm:$0xff]
    %v1564 = vld [vmem:[#allocation17 + $0xd0] sm:$0xff]
    %v1565 = vld [vmem:[#allocation17 + $0xd8] sm:$0xff]
    %v1566 = vld [vmem:[#allocation17 + $0xe0] sm:$0xff]
    %v1567 = vld [vmem:[#allocation17 + $0xe8] sm:$0xff]
    %v1568 = vld [vmem:[#allocation17 + $0xf0] sm:$0xff]
    %v1569 = vld [vmem:[#allocation17 + $0xf8] sm:$0xff]
    %v1570 = vld [vmem:[#allocation17 + $0x100] sm:$0xff]
    %v1571 = vld [vmem:[#allocation17 + $0x108] sm:$0xff]
    %v1572 = vld [vmem:[#allocation17 + $0x110] sm:$0xff]
    %v1573 = vld [vmem:[#allocation17 + $0x118] sm:$0xff]
    %v1574 = vld [vmem:[#allocation17 + $0x120] sm:$0xff]
    %v1575 = vld [vmem:[#allocation17 + $0x128] sm:$0xff]
    %v1576 = vld [vmem:[#allocation17 + $0x130] sm:$0xff]
    %v1577 = vld [vmem:[#allocation17 + $0x138] sm:$0xff]
    %v1578 = vld [vmem:[#allocation17 + $0x140] sm:$0xff]
    %v1579 = vld [vmem:[#allocation17 + $0x148] sm:$0xff]
    %v1580 = vld [vmem:[#allocation17 + $0x150] sm:$0xff]
    %v1581 = vld [vmem:[#allocation17 + $0x158] sm:$0xff]
    %v1582 = vld [vmem:[#allocation17 + $0x160] sm:$0xff]
    %v1583 = vld [vmem:[#allocation17 + $0x168] sm:$0xff]
    %v1584 = vld [vmem:[#allocation17 + $0x170] sm:$0xff]
    %v1585 = vld [vmem:[#allocation17 + $0x178] sm:$0xff]
    %v1586 = vld [vmem:[#allocation17 + $0x180] sm:$0xff]
    %v1587 = vld [vmem:[#allocation17 + $0x188] sm:$0xff]
    %v1588 = vld [vmem:[#allocation17 + $0x190] sm:$0xff]
    %v1589 = vld [vmem:[#allocation17 + $0x198] sm:$0xff]
    %v1590 = vld [vmem:[#allocation17 + $0x1a0] sm:$0xff]
    %v1591 = vld [vmem:[#allocation17 + $0x1a8] sm:$0xff]
    %v1592 = vld [vmem:[#allocation17 + $0x1b0] sm:$0xff]
    %v1593 = vld [vmem:[#allocation17 + $0x1b8] sm:$0xff]
    %v1594 = vld [vmem:[#allocation17 + $0x1c0] sm:$0xff]
    %v1595 = vld [vmem:[#allocation17 + $0x1c8] sm:$0xff]
    %v1596 = vld [vmem:[#allocation17 + $0x1d0] sm:$0xff]
    %v1597 = vld [vmem:[#allocation17 + $0x1d8] sm:$0xff]
    %v1598 = vld [vmem:[#allocation17 + $0x1e0] sm:$0xff]
    %v1599 = vld [vmem:[#allocation17 + $0x1e8] sm:$0xff]
    %v1600 = vld [vmem:[#allocation17 + $0x1f0] sm:$0xff]
    %v1601 = vld [vmem:[#allocation17 + $0x1f8] sm:$0xff]
    %v1602 = vld [vmem:[%s19] sm:$0xf]
    %v1604 = vlaneseq
    %v1605 = vshrl.u32 %v1604, 7
    %v1606 = vsub.s32 0, %v1605
    %v1607 = vrot.slane %v1602, %v1606
    %v1608 = vlaneseq
    %v1609 = vshrl.u32 %v1608, 7
    %v1610 = vsub.s32 1, %v1609
    %v1611 = vrot.slane %v1602, %v1610
    %v1612 = vlaneseq
    %v1613 = vshrl.u32 %v1612, 7
    %v1614 = vsub.s32 2, %v1613
    %v1615 = vrot.slane %v1602, %v1614
    %v1616 = vlaneseq
    %v1617 = vshrl.u32 %v1616, 7
    %v1618 = vsub.s32 3, %v1617
    %v1619 = vrot.slane %v1602, %v1618
    %v1688 = vunpack.c.l.b16 %v1538
    %v1689 = vunpack.c.h.b16 %v1538
    %v1690 = vunpack.c.l.b16 %v1539
    %v1691 = vunpack.c.h.b16 %v1539
    %v1692 = vunpack.c.l.b16 %v1540
    %v1693 = vunpack.c.h.b16 %v1540
    %v1694 = vunpack.c.l.b16 %v1541
    %v1695 = vunpack.c.h.b16 %v1541
    %v1696 = vunpack.c.l.b16 %v1542
    %v1697 = vunpack.c.h.b16 %v1542
    %v1698 = vunpack.c.l.b16 %v1543
    %v1699 = vunpack.c.h.b16 %v1543
    %v1700 = vunpack.c.l.b16 %v1544
    %v1701 = vunpack.c.h.b16 %v1544
    %v1702 = vunpack.c.l.b16 %v1545
    %v1703 = vunpack.c.h.b16 %v1545
    %v1704 = vunpack.c.l.b16 %v1546
    %v1705 = vunpack.c.h.b16 %v1546
    %v1706 = vunpack.c.l.b16 %v1547
    %v1707 = vunpack.c.h.b16 %v1547
    %v1708 = vunpack.c.l.b16 %v1548
    %v1709 = vunpack.c.h.b16 %v1548
    %v1710 = vunpack.c.l.b16 %v1549
    %v1711 = vunpack.c.h.b16 %v1549
    %v1712 = vunpack.c.l.b16 %v1550
    %v1713 = vunpack.c.h.b16 %v1550
    %v1714 = vunpack.c.l.b16 %v1551
    %v1715 = vunpack.c.h.b16 %v1551
    %v1716 = vunpack.c.l.b16 %v1552
    %v1717 = vunpack.c.h.b16 %v1552
    %v1718 = vunpack.c.l.b16 %v1553
    %v1719 = vunpack.c.h.b16 %v1553
    %v1720 = vunpack.c.l.b16 %v1554
    %v1721 = vunpack.c.h.b16 %v1554
    %v1722 = vunpack.c.l.b16 %v1555
    %v1723 = vunpack.c.h.b16 %v1555
    %v1724 = vunpack.c.l.b16 %v1556
    %v1725 = vunpack.c.h.b16 %v1556
    %v1726 = vunpack.c.l.b16 %v1557
    %v1727 = vunpack.c.h.b16 %v1557
    %v1728 = vunpack.c.l.b16 %v1558
    %v1729 = vunpack.c.h.b16 %v1558
    %v1730 = vunpack.c.l.b16 %v1559
    %v1731 = vunpack.c.h.b16 %v1559
    %v1732 = vunpack.c.l.b16 %v1560
    %v1733 = vunpack.c.h.b16 %v1560
    %v1734 = vunpack.c.l.b16 %v1561
    %v1735 = vunpack.c.h.b16 %v1561
    %v1736 = vunpack.c.l.b16 %v1562
    %v1737 = vunpack.c.h.b16 %v1562
    %v1738 = vunpack.c.l.b16 %v1563
    %v1739 = vunpack.c.h.b16 %v1563
    %v1740 = vunpack.c.l.b16 %v1564
    %v1741 = vunpack.c.h.b16 %v1564
    %v1742 = vunpack.c.l.b16 %v1565
    %v1743 = vunpack.c.h.b16 %v1565
    %v1744 = vunpack.c.l.b16 %v1566
    %v1745 = vunpack.c.h.b16 %v1566
    %v1746 = vunpack.c.l.b16 %v1567
    %v1747 = vunpack.c.h.b16 %v1567
    %v1748 = vunpack.c.l.b16 %v1568
    %v1749 = vunpack.c.h.b16 %v1568
    %v1750 = vunpack.c.l.b16 %v1569
    %v1751 = vunpack.c.h.b16 %v1569
    %v1752 = vunpack.c.l.b16 %v1570
    %v1753 = vunpack.c.h.b16 %v1570
    %v1754 = vunpack.c.l.b16 %v1571
    %v1755 = vunpack.c.h.b16 %v1571
    %v1756 = vunpack.c.l.b16 %v1572
    %v1757 = vunpack.c.h.b16 %v1572
    %v1758 = vunpack.c.l.b16 %v1573
    %v1759 = vunpack.c.h.b16 %v1573
    %v1760 = vunpack.c.l.b16 %v1574
    %v1761 = vunpack.c.h.b16 %v1574
    %v1762 = vunpack.c.l.b16 %v1575
    %v1763 = vunpack.c.h.b16 %v1575
    %v1764 = vunpack.c.l.b16 %v1576
    %v1765 = vunpack.c.h.b16 %v1576
    %v1766 = vunpack.c.l.b16 %v1577
    %v1767 = vunpack.c.h.b16 %v1577
    %v1768 = vunpack.c.l.b16 %v1578
    %v1769 = vunpack.c.h.b16 %v1578
    %v1770 = vunpack.c.l.b16 %v1579
    %v1771 = vunpack.c.h.b16 %v1579
    %v1772 = vunpack.c.l.b16 %v1580
    %v1773 = vunpack.c.h.b16 %v1580
    %v1774 = vunpack.c.l.b16 %v1581
    %v1775 = vunpack.c.h.b16 %v1581
    %v1776 = vunpack.c.l.b16 %v1582
    %v1777 = vunpack.c.h.b16 %v1582
    %v1778 = vunpack.c.l.b16 %v1583
    %v1779 = vunpack.c.h.b16 %v1583
    %v1780 = vunpack.c.l.b16 %v1584
    %v1781 = vunpack.c.h.b16 %v1584
    %v1782 = vunpack.c.l.b16 %v1585
    %v1783 = vunpack.c.h.b16 %v1585
    %v1784 = vunpack.c.l.b16 %v1586
    %v1785 = vunpack.c.h.b16 %v1586
    %v1786 = vunpack.c.l.b16 %v1587
    %v1787 = vunpack.c.h.b16 %v1587
    %v1788 = vunpack.c.l.b16 %v1588
    %v1789 = vunpack.c.h.b16 %v1588
    %v1790 = vunpack.c.l.b16 %v1589
    %v1791 = vunpack.c.h.b16 %v1589
    %v1792 = vunpack.c.l.b16 %v1590
    %v1793 = vunpack.c.h.b16 %v1590
    %v1794 = vunpack.c.l.b16 %v1591
    %v1795 = vunpack.c.h.b16 %v1591
    %v1796 = vunpack.c.l.b16 %v1592
    %v1797 = vunpack.c.h.b16 %v1592
    %v1798 = vunpack.c.l.b16 %v1593
    %v1799 = vunpack.c.h.b16 %v1593
    %v1800 = vunpack.c.l.b16 %v1594
    %v1801 = vunpack.c.h.b16 %v1594
    %v1802 = vunpack.c.l.b16 %v1595
    %v1803 = vunpack.c.h.b16 %v1595
    %v1804 = vunpack.c.l.b16 %v1596
    %v1805 = vunpack.c.h.b16 %v1596
    %v1806 = vunpack.c.l.b16 %v1597
    %v1807 = vunpack.c.h.b16 %v1597
    %v1808 = vunpack.c.l.b16 %v1598
    %v1809 = vunpack.c.h.b16 %v1598
    %v1810 = vunpack.c.l.b16 %v1599
    %v1811 = vunpack.c.h.b16 %v1599
    %v1812 = vunpack.c.l.b16 %v1600
    %v1813 = vunpack.c.h.b16 %v1600
    %v1814 = vunpack.c.l.b16 %v1601
    %v1815 = vunpack.c.h.b16 %v1601
    %v1816 = vpack.c.b16 %v1692, %v1688
    %v1817 = vpack.c.b16 %v1693, %v1689
    %v1818 = vpack.c.b16 %v1694, %v1690
    %v1819 = vpack.c.b16 %v1695, %v1691
    %v1820 = vpack.c.b16 %v1700, %v1696
    %v1821 = vpack.c.b16 %v1701, %v1697
    %v1822 = vpack.c.b16 %v1702, %v1698
    %v1823 = vpack.c.b16 %v1703, %v1699
    %v1824 = vpack.c.b16 %v1708, %v1704
    %v1825 = vpack.c.b16 %v1709, %v1705
    %v1826 = vpack.c.b16 %v1710, %v1706
    %v1827 = vpack.c.b16 %v1711, %v1707
    %v1828 = vpack.c.b16 %v1716, %v1712
    %v1829 = vpack.c.b16 %v1717, %v1713
    %v1830 = vpack.c.b16 %v1718, %v1714
    %v1831 = vpack.c.b16 %v1719, %v1715
    %v1832 = vpack.c.b16 %v1724, %v1720
    %v1833 = vpack.c.b16 %v1725, %v1721
    %v1834 = vpack.c.b16 %v1726, %v1722
    %v1835 = vpack.c.b16 %v1727, %v1723
    %v1836 = vpack.c.b16 %v1732, %v1728
    %v1837 = vpack.c.b16 %v1733, %v1729
    %v1838 = vpack.c.b16 %v1734, %v1730
    %v1839 = vpack.c.b16 %v1735, %v1731
    %v1840 = vpack.c.b16 %v1740, %v1736
    %v1841 = vpack.c.b16 %v1741, %v1737
    %v1842 = vpack.c.b16 %v1742, %v1738
    %v1843 = vpack.c.b16 %v1743, %v1739
    %v1844 = vpack.c.b16 %v1748, %v1744
    %v1845 = vpack.c.b16 %v1749, %v1745
    %v1846 = vpack.c.b16 %v1750, %v1746
    %v1847 = vpack.c.b16 %v1751, %v1747
    %v1848 = vpack.c.b16 %v1756, %v1752
    %v1849 = vpack.c.b16 %v1757, %v1753
    %v1850 = vpack.c.b16 %v1758, %v1754
    %v1851 = vpack.c.b16 %v1759, %v1755
    %v1852 = vpack.c.b16 %v1764, %v1760
    %v1853 = vpack.c.b16 %v1765, %v1761
    %v1854 = vpack.c.b16 %v1766, %v1762
    %v1855 = vpack.c.b16 %v1767, %v1763
    %v1856 = vpack.c.b16 %v1772, %v1768
    %v1857 = vpack.c.b16 %v1773, %v1769
    %v1858 = vpack.c.b16 %v1774, %v1770
    %v1859 = vpack.c.b16 %v1775, %v1771
    %v1860 = vpack.c.b16 %v1780, %v1776
    %v1861 = vpack.c.b16 %v1781, %v1777
    %v1862 = vpack.c.b16 %v1782, %v1778
    %v1863 = vpack.c.b16 %v1783, %v1779
    %v1864 = vpack.c.b16 %v1788, %v1784
    %v1865 = vpack.c.b16 %v1789, %v1785
    %v1866 = vpack.c.b16 %v1790, %v1786
    %v1867 = vpack.c.b16 %v1791, %v1787
    %v1868 = vpack.c.b16 %v1796, %v1792
    %v1869 = vpack.c.b16 %v1797, %v1793
    %v1870 = vpack.c.b16 %v1798, %v1794
    %v1871 = vpack.c.b16 %v1799, %v1795
    %v1872 = vpack.c.b16 %v1804, %v1800
    %v1873 = vpack.c.b16 %v1805, %v1801
    %v1874 = vpack.c.b16 %v1806, %v1802
    %v1875 = vpack.c.b16 %v1807, %v1803
    %v1876 = vpack.c.b16 %v1812, %v1808
    %v1877 = vpack.c.b16 %v1813, %v1809
    %v1878 = vpack.c.b16 %v1814, %v1810
    %v1879 = vpack.c.b16 %v1815, %v1811
    %1944 = vmatprep.subr.bf16.mxu0 %v1817
    %1945 = vmatpush1.bf16.msra.mxu0 %v1816
    %1946 = vmatprep.subr.bf16.mxu0 %v1821
    %1947 = vmatpush1.bf16.msra.mxu0 %v1820
    %1948 = vmatprep.subr.bf16.mxu0 %v1825
    %1949 = vmatpush1.bf16.msra.mxu0 %v1824
    %1950 = vmatprep.subr.bf16.mxu0 %v1829
    %1951 = vmatpush1.bf16.msra.mxu0 %v1828
    %1952 = vmatprep.subr.bf16.mxu0 %v1833
    %1953 = vmatpush1.bf16.msra.mxu0 %v1832
    %1954 = vmatprep.subr.bf16.mxu0 %v1837
    %1955 = vmatpush1.bf16.msra.mxu0 %v1836
    %1956 = vmatprep.subr.bf16.mxu0 %v1841
    %1957 = vmatpush1.bf16.msra.mxu0 %v1840
    %1958 = vmatprep.subr.bf16.mxu0 %v1845
    %1959 = vmatpush1.bf16.msra.mxu0 %v1844
    %1960 = vmatprep.subr.bf16.mxu0 %v1849
    %1961 = vmatpush1.bf16.msra.mxu0 %v1848
    %1962 = vmatprep.subr.bf16.mxu0 %v1853
    %1963 = vmatpush1.bf16.msra.mxu0 %v1852
    %1964 = vmatprep.subr.bf16.mxu0 %v1857
    %1965 = vmatpush1.bf16.msra.mxu0 %v1856
    %1966 = vmatprep.subr.bf16.mxu0 %v1861
    %1967 = vmatpush1.bf16.msra.mxu0 %v1860
    %1968 = vmatprep.subr.bf16.mxu0 %v1865
    %1969 = vmatpush1.bf16.msra.mxu0 %v1864
    %1970 = vmatprep.subr.bf16.mxu0 %v1869
    %1971 = vmatpush1.bf16.msra.mxu0 %v1868
    %1972 = vmatprep.subr.bf16.mxu0 %v1873
    %1973 = vmatpush1.bf16.msra.mxu0 %v1872
    %1974 = vmatprep.subr.bf16.mxu0 %v1877
    %1975 = vmatpush1.bf16.msra.mxu0 %v1876
    %1976 = vmatprep.mubr.bf16.mxu0 %v1537
    %1977 = vmatmul.mubr.bf16.gmra.mrb[0].mxu0 %v1536
    %v1978 = vpop.f32.mrb[0].mxu0
    %v1979 = vadd.f32 %v1607, %v1978
    %v1980 = vpop.f32.mrb[0].mxu0
    %v1981 = vadd.f32 %v1611, %v1980
    %v1982 = vpop.f32.mrb[0].mxu0
    %v1983 = vpop.f32.mrb[0].mxu0
    %1984 = vdwg.mxu0
    %1985 = vmatprep.subr.bf16.mxu0 %v1819
    %1986 = vmatpush1.bf16.msra.mxu0 %v1818
    %1987 = vmatprep.subr.bf16.mxu0 %v1823
    %1988 = vmatpush1.bf16.msra.mxu0 %v1822
    %1989 = vmatprep.subr.bf16.mxu0 %v1827
    %1990 = vmatpush1.bf16.msra.mxu0 %v1826
    %1991 = vmatprep.subr.bf16.mxu0 %v1831
    %1992 = vmatpush1.bf16.msra.mxu0 %v1830
    %1993 = vmatprep.subr.bf16.mxu0 %v1835
    %1994 = vmatpush1.bf16.msra.mxu0 %v1834
    %1995 = vmatprep.subr.bf16.mxu0 %v1839
    %1996 = vmatpush1.bf16.msra.mxu0 %v1838
    %1997 = vmatprep.subr.bf16.mxu0 %v1843
    %1998 = vmatpush1.bf16.msra.mxu0 %v1842
    %1999 = vmatprep.subr.bf16.mxu0 %v1847
    %2000 = vmatpush1.bf16.msra.mxu0 %v1846
    %2001 = vmatprep.subr.bf16.mxu0 %v1851
    %2002 = vmatpush1.bf16.msra.mxu0 %v1850
    %2003 = vmatprep.subr.bf16.mxu0 %v1855
    %2004 = vmatpush1.bf16.msra.mxu0 %v1854
    %2005 = vmatprep.subr.bf16.mxu0 %v1859
    %2006 = vmatpush1.bf16.msra.mxu0 %v1858
    %2007 = vmatprep.subr.bf16.mxu0 %v1863
    %2008 = vmatpush1.bf16.msra.mxu0 %v1862
    %2009 = vmatprep.subr.bf16.mxu0 %v1867
    %2010 = vmatpush1.bf16.msra.mxu0 %v1866
    %2011 = vmatprep.subr.bf16.mxu0 %v1871
    %2012 = vmatpush1.bf16.msra.mxu0 %v1870
    %2013 = vmatprep.subr.bf16.mxu0 %v1875
    %2014 = vmatpush1.bf16.msra.mxu0 %v1874
    %2015 = vmatprep.subr.bf16.mxu0 %v1879
    %2016 = vmatpush1.bf16.msra.mxu0 %v1878
    %2017 = vmatprep.mubr.bf16.mxu0 %v1537
    %2018 = vmatmul.mubr.bf16.gmra.mrb[0].mxu0 %v1536
    %v2019 = vpop.f32.mrb[0].mxu0
    %v2020 = vadd.f32 %v1615, %v2019
    %v2021 = vpop.f32.mrb[0].mxu0
    %v2022 = vadd.f32 %v1619, %v2021
    %v2023 = vpop.f32.mrb[0].mxu0
    %v2024 = vpop.f32.mrb[0].mxu0
    %2025 = vdwg.mxu0
    %v2026 = vsub.f32 0.0, %v1979
    %v2027 = vsub.f32 0.0, %v1981
    %v2028 = vsub.f32 0.0, %v2020
    %v2029 = vsub.f32 0.0, %v2022
    %v2030 = vmul.f32 %v2026, 1.442695
    %v2031 = vpow.pop %v2030
    %v2032 = vmul.f32 %v2027, 1.442695
    %v2033 = vpow.pop %v2032
    %v2034 = vmul.f32 %v2028, 1.442695
    %v2035 = vpow.pop %v2034
    %v2036 = vmul.f32 %v2029, 1.442695
    %v2037 = vpow.pop %v2036
    %v2038 = vadd.f32 %v2031, 1.0
    %v2039 = vadd.f32 %v2033, 1.0
    %v2040 = vadd.f32 %v2035, 1.0
    %v2041 = vadd.f32 %v2037, 1.0
    %v2042 = vrcp.pop %v2038
    %v2043 = vmul.f32 1.0, %v2042
    %v2044 = vrcp.pop %v2039
    %v2045 = vmul.f32 1.0, %v2044
    %v2046 = vrcp.pop %v2040
    %v2047 = vmul.f32 1.0, %v2046
    %v2048 = vrcp.pop %v2041
    %v2049 = vmul.f32 1.0, %v2048
    %2050 = vst [vmem:[#allocation19] sm:$0xff] %v2043
    %2051 = vst [vmem:[#allocation19 + $0x8] sm:$0xff] %v2045
    %2052 = vst [vmem:[#allocation19 + $0x10] sm:$0xff] %v2047
    %2053 = vst [vmem:[#allocation19 + $0x18] sm:$0xff] %v2049
    %2054 = vst.msk [vmem:[#allocation20] sm:$0xff] %vm1226, %v1083
    %2055 = vst.msk [vmem:[#allocation22] sm:$0xff] %vm1226, %v1194
    // Predicated region
    $region122: #{vae_forward.1} parent=1 // pred_check
      _
    $region123: #{vae_forward.1} parent=1 // pred_check_branch
      %2057 = sbr.rel (0) target = $region125
    $region124: #{vae_forward.1} parent=1 // pred_region
      %s2059 = ssub.s32 512, 512
      %2060 = vsyncadd [#allocation4], %s2059
      %s2062 = sshll.u32 [#allocation19], 4
      %s2063 = int_to_ptr.vmem [resolvable:$true] %s2062
      %2065 = dma.vmem_to_hbm [thread:$0]  %s2063, 512, %s20, [#allocation4]
    $region125: #{vae_forward.1} parent=1 // pred_fallthru
      _
    // Predicated region
    $region126: #{vae_forward.1} parent=1 // pred_check
      _
    $region127: #{vae_forward.1} parent=1 // pred_check_branch
      %2067 = sbr.rel (0) target = $region129
    $region128: #{vae_forward.1} parent=1 // pred_region
      %s2069 = ssub.s32 128, 128
      %2070 = vsyncadd [#allocation21], %s2069
      %s2072 = sshll.u32 [#allocation20], 4
      %s2073 = int_to_ptr.vmem [resolvable:$true] %s2072
      %2075 = dma.vmem_to_hbm [thread:$0]  %s2073, 128, %s21, [#allocation21]
    $region129: #{vae_forward.1} parent=1 // pred_fallthru
      _
    // Predicated region
    $region130: #{vae_forward.1} parent=1 // pred_check
      _
    $region131: #{vae_forward.1} parent=1 // pred_check_branch
      %2077 = sbr.rel (0) target = $region133
    $region132: #{vae_forward.1} parent=1 // pred_region
      %s2079 = ssub.s32 128, 128
      %2080 = vsyncadd [#allocation21], %s2079
      %s2082 = sshll.u32 [#allocation22], 4
      %s2083 = int_to_ptr.vmem [resolvable:$true] %s2082
      %2085 = dma.vmem_to_hbm [thread:$0]  %s2083, 128, %s22, [#allocation21]
    $region133: #{vae_forward.1} parent=1 // pred_fallthru
      _
    // Predicated region
    $region134: #{vae_forward.1} parent=1 // pred_check
      _
    $region135: #{vae_forward.1} parent=1 // pred_check_branch
      %2087 = sbr.rel (0) target = $region137
    $region136: #{vae_forward.1} parent=1 // pred_region
      %2088 = dma.done [#allocation4], 512
    $region137: #{vae_forward.1} parent=1 // pred_fallthru
      _
    // Predicated region
    $region138: #{vae_forward.1} parent=1 // pred_check
      _
    $region139: #{vae_forward.1} parent=1 // pred_check_branch
      %2090 = sbr.rel (0) target = $region141
    $region140: #{vae_forward.1} parent=1 // pred_region
      %2091 = dma.done [#allocation21], 128
    $region141: #{vae_forward.1} parent=1 // pred_fallthru
      _
    // Predicated region
    $region142: #{vae_forward.1} parent=1 // pred_check
      _
    $region143: #{vae_forward.1} parent=1 // pred_check_branch
      %2093 = sbr.rel (0) target = $region145
    $region144: #{vae_forward.1} parent=1 // pred_region
      %2094 = dma.done [#allocation21], 128
    $region145: #{vae_forward.1} parent=1 // pred_fallthru
      _
    %2095 = vsyncpa [#allocation3], 1
    %2096 = vsyncpa [#allocation6], 1
    %2097 = vsyncpa [#allocation9], 1
    %2098 = vsyncpa [#allocation12], 1
    %2099 = vsyncpa [#allocation15], 1
    %2100 = vsyncpa [#allocation18], 1
    %2101 = vsyncpa [#allocation4], 1
    %2102 = vsyncpa [#allocation21], 1

</llo_original>
